<compile_context>
chip_gen: v7x
topology: tpu7x:2x2x1
jax: 0.10.0
libtpu: 0.0.40
codegen_flags: <defaults>
</compile_context>

<pallas_src>
import functools
import numpy as np
import jax
import jax.numpy as jnp
from jax.experimental import pallas as pl
from jax.experimental.pallas import tpu as pltpu


def _round_up(x, m):
    return (x + m - 1) // m * m


# ----------------------------- Pallas kernel --------------------------------
def lc_kernel(fmaps_ref, logits_ref, boxes_ref, wf_ref, wp_ref, wpe_ref,
              w4_ref, pb_ref, dists_ref, preds_ref, *, num_classes):
    mxu_dtype = wf_ref.dtype

    # pos_embed path folded to one affine + ReLU:
    #   center_size -> BatchNorm1d(eval) -> Linear(4,128)  ==  boxes @ W4 + b
    # K=4 is MXU-hostile, so do it as 4 VPU broadcast fmas.
    boxes = boxes_ref[...].astype(jnp.float32)                 # [tn, 4]
    w4 = w4_ref[...]                                           # [4, 128] f32
    pos_h = pb_ref[...]                                        # [1, 128] -> broadcast
    for j in range(4):
        pos_h = pos_h + boxes[:, j:j + 1] * w4[j:j + 1, :]
    pos_h = jnp.maximum(pos_h, 0.0)                            # ReLU (Dropout = id in eval)

    # softmax over the true class logits; exp + approx reciprocal ride the EUP slot.
    logits = logits_ref[...].astype(jnp.float32)               # [tn, C]
    m = jnp.max(logits, axis=1, keepdims=True)
    ex = jnp.exp(logits - m)
    probs = ex * pl.reciprocal(jnp.sum(ex, axis=1, keepdims=True), approx=True)

    # decoder_lin: three MXU matmuls with f32 accumulation.
    #   dists = fmaps @ Wf + pos_h @ Wp + softmax(L) @ (emb_w @ W_e + dec_b)
    # (embedding matmul and decoder bias folded into Wpe; softmax rows sum to 1.)
    dists = jnp.dot(fmaps_ref[...].astype(mxu_dtype), wf_ref[...],
                    preferred_element_type=jnp.float32)
    dists = dists + jnp.dot(pos_h.astype(mxu_dtype), wp_ref[...],
                            preferred_element_type=jnp.float32)
    dists = dists + jnp.dot(probs.astype(mxu_dtype), wpe_ref[...],
                            preferred_element_type=jnp.float32)
    dists_ref[...] = dists

    # obj_preds = argmax over classes 1..C-1 (background col 0 and lane padding
    # masked).  First-max index via max-reduce + min-of-matching-column (XLU).
    cp = dists.shape[1]
    col = jax.lax.broadcasted_iota(jnp.int32, dists.shape, 1)
    valid = (col >= 1) & (col < num_classes)
    masked = jnp.where(valid, dists, -jnp.inf)
    mx = jnp.max(masked, axis=1, keepdims=True)
    idx = jnp.where((masked == mx) & valid, col, cp)
    preds_ref[...] = jnp.min(idx, axis=1, keepdims=True).astype(jnp.int32)


# ------------------------ one-time parameter preparation ---------------------
def prepare_lc_params(params, matmul_dtype=jnp.bfloat16):
    """Split/fold/pad/cast the LC weights once; reuse across forward calls."""
    emb_w = params["emb_w"]                       # [C, E]
    pos_w = params["pos_w"]                       # [4, PH]
    pos_b = params["pos_b"]                       # [PH]
    dec_w = params["dec_w"]                       # [D + E + PH, C]
    dec_b = params["dec_b"]                       # [C]
    bn_scale = params["bn_scale"].reshape(-1)     # [4]  (gamma / sqrt(var + eps))
    bn_shift = params["bn_shift"].reshape(-1)     # [4]  (beta - mean * scale)

    c, e = emb_w.shape
    ph = pos_w.shape[1]
    d_obj = dec_w.shape[0] - e - ph
    cp = _round_up(c, 128)                        # lane-dense class axis

    wf = dec_w[:d_obj]                            # fmaps part of decoder
    we = dec_w[d_obj:d_obj + e]                   # embed part
    wp = dec_w[d_obj + e:]                        # pos part

    # exact algebraic folds:
    #   softmax(L) @ emb_w @ we == softmax(L) @ (emb_w @ we);  dec_b folds in since
    #   softmax rows sum to 1 over the (unpadded) true class columns.
    wpe = emb_w @ we + dec_b[None, :]

    # center_size (x1,y1,x2,y2)->(cx,cy,w,h) is affine: pos4 = boxes @ T + t
    t_cs = jnp.array([[0.5, 0.0, -1.0, 0.0],
                      [0.0, 0.5, 0.0, -1.0],
                      [0.5, 0.0, 1.0, 0.0],
                      [0.0, 0.5, 0.0, 1.0]], jnp.float32)
    t_off = jnp.array([0.5, 0.5, 1.0, 1.0], jnp.float32)
    # fold BN(eval) affine and Linear(4,128): pos_h_pre = boxes @ W4 + b
    w4 = (t_cs * bn_scale[None, :]) @ pos_w                          # [4, PH]
    b4h = ((t_off * bn_scale + bn_shift) @ pos_w + pos_b).reshape(1, ph)

    pad_c = ((0, 0), (0, cp - c))
    return {
        "wf": jnp.pad(wf, pad_c).astype(matmul_dtype),    # [D,  cp]
        "wp": jnp.pad(wp, pad_c).astype(matmul_dtype),    # [PH, cp]
        "wpe": jnp.pad(wpe, pad_c).astype(matmul_dtype),  # [C,  cp] (bias folded)
        "w4": w4.astype(jnp.float32),                     # [4,  PH]
        "pos_b": b4h.astype(jnp.float32),                 # [1,  PH]
    }


def _pick_tile_n(n, matmul_dtype):
    # Big row tiles fill the MXU and amortize per-grid-step overhead (~0.35us).
    # For tiny N keep >= 2 grid steps so the 'parallel' axis can span both v7x TCs.
    if n >= 1024:
        return 512 if jnp.dtype(matmul_dtype).itemsize <= 2 else 256
    if n >= 512:
        return 256
    if n >= 256:
        return 128
    return max(8, _round_up(pl.cdiv(n, 2), 8))


# ------------------------------ JAX wrapper ----------------------------------
@functools.partial(jax.jit, static_argnames=("tile_n", "single_buffer_weights"))
def lc_forward(obj_fmaps, obj_logits, box_priors, prep, *,
               tile_n=None, single_buffer_weights=True):
    n, d_obj = obj_fmaps.shape
    c = obj_logits.shape[1]
    wf, wp, wpe = prep["wf"], prep["wp"], prep["wpe"]
    w4, pos_b = prep["w4"], prep["pos_b"]
    cp = wf.shape[1]
    ph = wp.shape[0]
    mxu_dtype = wf.dtype

    if tile_n is None:
        tile_n = _pick_tile_n(n, mxu_dtype)
    grid = (pl.cdiv(n, tile_n),)          # ragged N: boundary blocks handled by Pallas

    rows = lambda i: (i, 0)
    full = lambda i: (0, 0)
    if single_buffer_weights:
        # grid-invariant operands: double-buffering buys nothing, halve their VMEM
        wspec = lambda shape: pl.BlockSpec(shape, full, pipeline_mode=pl.Buffered(1))
    else:
        wspec = lambda shape: pl.BlockSpec(shape, full)

    # rough VMEM budget -> scoped-vmem limit (floor 32 MiB, cap at v7x 64 MiB physical)
    in_sz = jnp.dtype(obj_fmaps.dtype).itemsize
    w_sz = jnp.dtype(mxu_dtype).itemsize
    wmult = 1 if single_buffer_weights else 2
    est = (tile_n * d_obj * (2 * in_sz + w_sz)            # fmaps double-buf + cast copy
           + 2 * tile_n * (c + 4) * 4                     # logits + boxes buffers
           + wmult * (d_obj + ph + c) * cp * w_sz         # resident weights
           + 6 * tile_n * cp * 4                          # dists out bufs + f32 temps
           + 4 * (5 * ph + tile_n))
    vmem_limit = int(min(max(3 * est, 32 * 2**20), 64 * 2**20))

    dists_p, preds_p = pl.pallas_call(
        functools.partial(lc_kernel, num_classes=c),
        grid=grid,
        in_specs=[
            pl.BlockSpec((tile_n, d_obj), rows),   # obj_fmaps row tile (no concat/pad copy)
            pl.BlockSpec((tile_n, c), rows),       # obj_logits row tile (true C columns)
            pl.BlockSpec((tile_n, 4), rows),       # box_priors row tile
            wspec((d_obj, cp)),                    # Wf  (resident)
            wspec((ph, cp)),                       # Wp  (resident)
            wspec((c, cp)),                        # Wpe = emb_w @ W_e + dec_b (resident)
            pl.BlockSpec((4, ph), full),           # W4  (pos affine fold)
            pl.BlockSpec((1, ph), full),           # pos bias fold
        ],
        out_specs=[
            pl.BlockSpec((tile_n, cp), rows),
            pl.BlockSpec((tile_n, 1), rows),
        ],
        out_shape=(
            jax.ShapeDtypeStruct((n, cp), jnp.float32),
            jax.ShapeDtypeStruct((n, 1), jnp.int32),
        ),
        compiler_params=pltpu.CompilerParams(
            dimension_semantics=("parallel",),
            vmem_limit_bytes=vmem_limit),
    )(obj_fmaps, obj_logits, box_priors, wf, wp, wpe, w4, pos_b)

    # TODO(synk): the sgdet-eval per-class apply_nms suppression loop has no clean
    #             Pallas equivalent; modeled as keep-all, so obj_preds is the plain
    #             argmax(dists[:, 1:]) + 1 computed in-kernel.
    return dists_p[:, :c], preds_p[:, 0]


# ------------------------- pure-JAX reference (check) -------------------------
def center_size_bn(boxes, bn_scale, bn_shift):
    wh = boxes[:, 2:4] - boxes[:, 0:2] + 1.0
    ctr = boxes[:, 0:2] + 0.5 * wh
    return jnp.concatenate([ctr, wh], axis=1) * bn_scale + bn_shift


def lc_reference(obj_fmaps, obj_logits, box_priors, params):
    probs = jax.nn.softmax(obj_logits, axis=1)
    obj_embed = probs @ params["emb_w"]
    pos4 = center_size_bn(box_priors, params["bn_scale"], params["bn_shift"])
    pos_h = jnp.maximum(pos4 @ params["pos_w"] + params["pos_b"], 0.0)
    rep = jnp.concatenate([obj_fmaps, obj_embed, pos_h], axis=1)
    dists = rep @ params["dec_w"] + params["dec_b"]
    preds = jnp.argmax(dists[:, 1:], axis=1).astype(jnp.int32) + 1
    return dists, preds


# --------------------------------- main ---------------------------------------
if __name__ == "__main__":
    N, C, E, D_OBJ, POS_H = 16, 16, 32, 256, 128

    key = jax.random.PRNGKey(0)
    k = jax.random.split(key, 8)

    params = {
        "emb_w": jax.random.normal(k[0], (C, E), jnp.float32) * 0.1,      # obj_edge_vectors
        "pos_w": jax.random.normal(k[1], (4, POS_H), jnp.float32) * 0.1,  # Linear(4,128).weight.T
        "pos_b": jax.random.normal(k[2], (POS_H,), jnp.float32) * 0.01,
        "dec_w": jax.random.normal(k[3], (D_OBJ + E + POS_H, C), jnp.float32) * 0.02,
        "dec_b": jax.random.normal(k[4], (C,), jnp.float32) * 0.01,
        # BatchNorm1d(4) eval: gamma=1, beta=0, running_mean=0, running_var=1, eps=1e-5
        "bn_scale": jnp.ones((1, 4), jnp.float32) / jnp.sqrt(1.0 + 1e-5),
        "bn_shift": jnp.zeros((1, 4), jnp.float32),
    }

    obj_fmaps = jax.random.normal(k[5], (N, D_OBJ), jnp.float32)
    obj_logits = jax.random.normal(k[6], (N, C), jnp.float32)
    xy = jax.random.uniform(k[7], (N, 2), jnp.float32, 0.0, 200.0)
    wh = jax.random.uniform(jax.random.fold_in(key, 99), (N, 2), jnp.float32, 10.0, 100.0)
    box_priors = jnp.concatenate([xy, xy + wh], axis=1)  # (x1, y1, x2, y2)

    ref_dists, ref_preds = lc_reference(obj_fmaps, obj_logits, box_priors, params)

    # one-time weight prep (splits / folds / padding / casts hoisted off the hot path)
    prep_f32 = prepare_lc_params(params, matmul_dtype=jnp.float32)
    prep_bf16 = prepare_lc_params(params)                 # bf16 is the recommended default

    # ---- f32 MXU operands: tight check; also probes single-buffered weights -------
    try:
        dists, preds = lc_forward(obj_fmaps, obj_logits, box_priors, prep_f32)
        jax.block_until_ready((dists, preds))
        sbw = True
    except Exception:
        # graceful fallback if this jax/libtpu rejects pl.Buffered(1) single-buffering
        sbw = False
        dists, preds = lc_forward(obj_fmaps, obj_logits, box_priors, prep_f32,
                                  single_buffer_weights=False)
        jax.block_until_ready((dists, preds))

    assert np.allclose(np.asarray(dists), np.asarray(ref_dists),
                       atol=1e-3, rtol=1e-3), "f32 dists mismatch"
    assert np.array_equal(np.asarray(preds), np.asarray(ref_preds)), "f32 preds mismatch"

    # ---- ragged N (not a multiple of the tile): boundary blocks, no HBM row padding
    nr = 13
    dists_r, preds_r = lc_forward(obj_fmaps[:nr], obj_logits[:nr], box_priors[:nr],
                                  prep_f32, single_buffer_weights=sbw)
    jax.block_until_ready((dists_r, preds_r))
    ref_d_r, ref_p_r = lc_reference(obj_fmaps[:nr], obj_logits[:nr], box_priors[:nr], params)
    assert dists_r.shape == (nr, C)
    assert np.allclose(np.asarray(dists_r), np.asarray(ref_d_r),
                       atol=1e-3, rtol=1e-3), "ragged dists mismatch"
    assert np.array_equal(np.asarray(preds_r), np.asarray(ref_p_r)), "ragged preds mismatch"

    # ---- bf16 MXU operands (default recommendation on v5e/v6e/v7x), f32 accumulation
    dists_bf, preds_bf = lc_forward(obj_fmaps, obj_logits, box_priors, prep_bf16,
                                    single_buffer_weights=sbw)
    jax.block_until_ready((dists_bf, preds_bf))
    assert np.allclose(np.asarray(dists_bf), np.asarray(ref_dists),
                       atol=3e-1, rtol=5e-2), "bf16 dists mismatch (loose tol)"
    agree = float(np.mean(np.asarray(preds_bf) == np.asarray(ref_preds)))
    assert agree >= 0.8, f"bf16 preds agreement too low: {agree:.3f}"

    print("KERNEL_OK")
</pallas_src>

<mosaic_0001>
module attributes {stable_mosaic.version = 11 : i64} {
  func.func @lc_kernel(%arg0: i32, %arg1: memref<8x256xf32, #tpu.memory_space<vmem>>, %arg2: memref<8x16xf32, #tpu.memory_space<vmem>>, %arg3: memref<8x4xf32, #tpu.memory_space<vmem>>, %arg4: memref<256x128xf32, #tpu.memory_space<vmem>>, %arg5: memref<128x128xf32, #tpu.memory_space<vmem>>, %arg6: memref<16x128xf32, #tpu.memory_space<vmem>>, %arg7: memref<4x128xf32, #tpu.memory_space<vmem>>, %arg8: memref<1x128xf32, #tpu.memory_space<vmem>>, %arg9: memref<8x128xf32, #tpu.memory_space<vmem>>, %arg10: memref<8x1xi32, #tpu.memory_space<vmem>>) attributes {dimension_semantics = [#tpu.dimension_semantics<parallel>], iteration_bounds = array<i64: 2>, scalar_prefetch = 0 : i64, scratch_operands = 0 : i64, tpu.core_type = #tpu.core_type<tc>, window_params = [{transform_indices = @transform_0, window_bounds = array<i64: 8, 256>}, {transform_indices = @transform_1, window_bounds = array<i64: 8, 16>}, {transform_indices = @transform_2, window_bounds = array<i64: 8, 4>}, {pipeline_mode = #tpu.pipeline_mode<synchronous>, transform_indices = @transform_3, window_bounds = array<i64: 256, 128>}, {pipeline_mode = #tpu.pipeline_mode<synchronous>, transform_indices = @transform_4, window_bounds = array<i64: 128, 128>}, {pipeline_mode = #tpu.pipeline_mode<synchronous>, transform_indices = @transform_5, window_bounds = array<i64: 16, 128>}, {pipeline_mode = #tpu.pipeline_mode<synchronous>, transform_indices = @transform_6, window_bounds = array<i64: 4, 128>}, {pipeline_mode = #tpu.pipeline_mode<synchronous>, transform_indices = @transform_7, window_bounds = array<i64: 1, 128>}, {transform_indices = @transform_8, window_bounds = array<i64: 8, 128>}, {transform_indices = @transform_9, window_bounds = array<i64: 8, 1>}]} {
    %c0 = arith.constant 0 : index
    %c0_0 = arith.constant 0 : index
    %0 = vector.load %arg3[%c0, %c0_0] : memref<8x4xf32, #tpu.memory_space<vmem>>, vector<8x4xf32>
    %c0_1 = arith.constant 0 : index
    %c0_2 = arith.constant 0 : index
    %1 = vector.load %arg7[%c0_1, %c0_2] : memref<4x128xf32, #tpu.memory_space<vmem>>, vector<4x128xf32>
    %c0_3 = arith.constant 0 : index
    %c0_4 = arith.constant 0 : index
    %2 = vector.load %arg8[%c0_3, %c0_4] : memref<1x128xf32, #tpu.memory_space<vmem>>, vector<1x128xf32>
    %3 = vector.extract_strided_slice %0 {offsets = [0, 0], sizes = [8, 1], strides = [1, 1]} : vector<8x4xf32> to vector<8x1xf32>
    %4 = vector.extract_strided_slice %1 {offsets = [0, 0], sizes = [1, 128], strides = [1, 1]} : vector<4x128xf32> to vector<1x128xf32>
    %5 = vector.broadcast %3 : vector<8x1xf32> to vector<8x128xf32>
    %6 = vector.broadcast %4 : vector<1x128xf32> to vector<8x128xf32>
    %7 = arith.mulf %5, %6 : vector<8x128xf32>
    %8 = vector.broadcast %2 : vector<1x128xf32> to vector<8x128xf32>
    %9 = arith.addf %8, %7 : vector<8x128xf32>
    %10 = vector.extract_strided_slice %0 {offsets = [0, 1], sizes = [8, 1], strides = [1, 1]} : vector<8x4xf32> to vector<8x1xf32>
    %11 = vector.extract_strided_slice %1 {offsets = [1, 0], sizes = [1, 128], strides = [1, 1]} : vector<4x128xf32> to vector<1x128xf32>
    %12 = vector.broadcast %10 : vector<8x1xf32> to vector<8x128xf32>
    %13 = vector.broadcast %11 : vector<1x128xf32> to vector<8x128xf32>
    %14 = arith.mulf %12, %13 : vector<8x128xf32>
    %15 = arith.addf %9, %14 : vector<8x128xf32>
    %16 = vector.extract_strided_slice %0 {offsets = [0, 2], sizes = [8, 1], strides = [1, 1]} : vector<8x4xf32> to vector<8x1xf32>
    %17 = vector.extract_strided_slice %1 {offsets = [2, 0], sizes = [1, 128], strides = [1, 1]} : vector<4x128xf32> to vector<1x128xf32>
    %18 = vector.broadcast %16 : vector<8x1xf32> to vector<8x128xf32>
    %19 = vector.broadcast %17 : vector<1x128xf32> to vector<8x128xf32>
    %20 = arith.mulf %18, %19 : vector<8x128xf32>
    %21 = arith.addf %15, %20 : vector<8x128xf32>
    %22 = vector.extract_strided_slice %0 {offsets = [0, 3], sizes = [8, 1], strides = [1, 1]} : vector<8x4xf32> to vector<8x1xf32>
    %23 = vector.extract_strided_slice %1 {offsets = [3, 0], sizes = [1, 128], strides = [1, 1]} : vector<4x128xf32> to vector<1x128xf32>
    %24 = vector.broadcast %22 : vector<8x1xf32> to vector<8x128xf32>
    %25 = vector.broadcast %23 : vector<1x128xf32> to vector<8x128xf32>
    %26 = arith.mulf %24, %25 : vector<8x128xf32>
    %27 = arith.addf %21, %26 : vector<8x128xf32>
    %cst = arith.constant 0.000000e+00 : f32
    %28 = vector.broadcast %cst : f32 to vector<8x128xf32>
    %29 = arith.maximumf %27, %28 : vector<8x128xf32>
    %c0_5 = arith.constant 0 : index
    %c0_6 = arith.constant 0 : index
    %30 = vector.load %arg2[%c0_5, %c0_6] : memref<8x16xf32, #tpu.memory_space<vmem>>, vector<8x16xf32>
    %cst_7 = arith.constant dense<0xFF800000> : vector<8xf32>
    %31 = vector.multi_reduction <maximumf>, %30, %cst_7 [1] : vector<8x16xf32> to vector<8xf32>
    %32 = vector.shape_cast %31 : vector<8xf32> to vector<8x1xf32>
    %33 = vector.broadcast %32 : vector<8x1xf32> to vector<8x16xf32>
    %34 = arith.subf %30, %33 : vector<8x16xf32>
    %35 = math.exp %34 : vector<8x16xf32>
    %cst_8 = arith.constant dense<0.000000e+00> : vector<8xf32>
    %36 = vector.multi_reduction <add>, %35, %cst_8 [1] : vector<8x16xf32> to vector<8xf32>
    %37 = vector.shape_cast %36 : vector<8xf32> to vector<8x1xf32>
    %38 = tpu.reciprocal %37 {approx = true} : vector<8x1xf32> -> vector<8x1xf32>
    %39 = vector.broadcast %38 : vector<8x1xf32> to vector<8x16xf32>
    %40 = arith.mulf %35, %39 : vector<8x16xf32>
    %c0_9 = arith.constant 0 : index
    %c0_10 = arith.constant 0 : index
    %41 = vector.load %arg1[%c0_9, %c0_10] : memref<8x256xf32, #tpu.memory_space<vmem>>, vector<8x256xf32>
    %c0_11 = arith.constant 0 : index
    %c0_12 = arith.constant 0 : index
    %42 = vector.load %arg4[%c0_11, %c0_12] : memref<256x128xf32, #tpu.memory_space<vmem>>, vector<256x128xf32>
    %cst_13 = arith.constant dense<0.000000e+00> : vector<8x128xf32>
    %43 = tpu.matmul %41, %42, %cst_13 {dimension_numbers = #tpu.dot_dimension_numbers<[1], [0], [0], [1], [0, 0, 1, 1], [], []>} : vector<8x256xf32>, vector<256x128xf32>, vector<8x128xf32> -> vector<8x128xf32>
    %c0_14 = arith.constant 0 : index
    %c0_15 = arith.constant 0 : index
    %44 = vector.load %arg5[%c0_14, %c0_15] : memref<128x128xf32, #tpu.memory_space<vmem>>, vector<128x128xf32>
    %cst_16 = arith.constant dense<0.000000e+00> : vector<8x128xf32>
    %45 = tpu.matmul %29, %44, %cst_16 {dimension_numbers = #tpu.dot_dimension_numbers<[1], [0], [0], [1], [0, 0, 1, 1], [], []>} : vector<8x128xf32>, vector<128x128xf32>, vector<8x128xf32> -> vector<8x128xf32>
    %46 = arith.addf %43, %45 : vector<8x128xf32>
    %c0_17 = arith.constant 0 : index
    %c0_18 = arith.constant 0 : index
    %47 = vector.load %arg6[%c0_17, %c0_18] : memref<16x128xf32, #tpu.memory_space<vmem>>, vector<16x128xf32>
    %cst_19 = arith.constant dense<0.000000e+00> : vector<8x128xf32>
    %48 = tpu.matmul %40, %47, %cst_19 {dimension_numbers = #tpu.dot_dimension_numbers<[1], [0], [0], [1], [0, 0, 1, 1], [], []>} : vector<8x16xf32>, vector<16x128xf32>, vector<8x128xf32> -> vector<8x128xf32>
    %49 = arith.addf %46, %48 : vector<8x128xf32>
    %c0_20 = arith.constant 0 : index
    %c0_21 = arith.constant 0 : index
    %50 = vector.load %arg9[%c0_20, %c0_21] : memref<8x128xf32, #tpu.memory_space<vmem>>, vector<8x128xf32>
    tpu.vector_store %arg9[%c0_20, %c0_21], %49 {strides = array<i32>} : memref<8x128xf32, #tpu.memory_space<vmem>>, vector<8x128xf32>,
    %51 = tpu.iota {dimensions = array<i32: 1>} : vector<8x128xi32>
    %c1_i32 = arith.constant 1 : i32
    %52 = vector.broadcast %c1_i32 : i32 to vector<8x128xi32>
    %53 = arith.cmpi sge, %51, %52 : vector<8x128xi32>
    %c16_i32 = arith.constant 16 : i32
    %54 = vector.broadcast %c16_i32 : i32 to vector<8x128xi32>
    %55 = arith.cmpi slt, %51, %54 : vector<8x128xi32>
    %56 = arith.andi %53, %55 : vector<8x128xi1>
    %cst_22 = arith.constant 0xFF800000 : f32
    %57 = vector.broadcast %cst_22 : f32 to vector<8x128xf32>
    %58 = arith.select %56, %49, %57 : vector<8x128xi1>, vector<8x128xf32>
    %cst_23 = arith.constant dense<0xFF800000> : vector<8xf32>
    %59 = vector.multi_reduction <maximumf>, %58, %cst_23 [1] : vector<8x128xf32> to vector<8xf32>
    %60 = vector.shape_cast %59 : vector<8xf32> to vector<8x1xf32>
    %61 = vector.broadcast %60 : vector<8x1xf32> to vector<8x128xf32>
    %62 = arith.cmpf oeq, %58, %61 : vector<8x128xf32>
    %63 = arith.andi %62, %56 : vector<8x128xi1>
    %c128_i32 = arith.constant 128 : i32
    %64 = vector.broadcast %c128_i32 : i32 to vector<8x128xi32>
    %65 = arith.select %63, %51, %64 : vector<8x128xi1>, vector<8x128xi32>
    %cst_24 = arith.constant dense<2147483647> : vector<8xi32>
    %66 = vector.multi_reduction <minsi>, %65, %cst_24 [1] : vector<8x128xi32> to vector<8xi32>
    %67 = vector.shape_cast %66 : vector<8xi32> to vector<8x1xi32>
    %c0_25 = arith.constant 0 : index
    %c0_26 = arith.constant 0 : index
    %68 = vector.load %arg10[%c0_25, %c0_26] : memref<8x1xi32, #tpu.memory_space<vmem>>, vector<8x1xi32>
    tpu.vector_store %arg10[%c0_25, %c0_26], %67 {strides = array<i32>} : memref<8x1xi32, #tpu.memory_space<vmem>>, vector<8x1xi32>,
    return
  }
  func.func @transform_0(%arg0: i32) -> (i32, i32) {
    %c0_i32 = arith.constant 0 : i32
    %c0_i32_0 = arith.constant 0 : i32
    return %arg0, %c0_i32 : i32, i32
  }
  func.func @transform_1(%arg0: i32) -> (i32, i32) {
    %c0_i32 = arith.constant 0 : i32
    %c0_i32_0 = arith.constant 0 : i32
    return %arg0, %c0_i32 : i32, i32
  }
  func.func @transform_2(%arg0: i32) -> (i32, i32) {
    %c0_i32 = arith.constant 0 : i32
    %c0_i32_0 = arith.constant 0 : i32
    return %arg0, %c0_i32 : i32, i32
  }
  func.func @transform_3(%arg0: i32) -> (i32, i32) {
    %c0_i32 = arith.constant 0 : i32
    %c0_i32_0 = arith.constant 0 : i32
    %c0_i32_1 = arith.constant 0 : i32
    return %c0_i32, %c0_i32_0 : i32, i32
  }
  func.func @transform_4(%arg0: i32) -> (i32, i32) {
    %c0_i32 = arith.constant 0 : i32
    %c0_i32_0 = arith.constant 0 : i32
    %c0_i32_1 = arith.constant 0 : i32
    return %c0_i32, %c0_i32_0 : i32, i32
  }
  func.func @transform_5(%arg0: i32) -> (i32, i32) {
    %c0_i32 = arith.constant 0 : i32
    %c0_i32_0 = arith.constant 0 : i32
    %c0_i32_1 = arith.constant 0 : i32
    return %c0_i32, %c0_i32_0 : i32, i32
  }
  func.func @transform_6(%arg0: i32) -> (i32, i32) {
    %c0_i32 = arith.constant 0 : i32
    %c0_i32_0 = arith.constant 0 : i32
    %c0_i32_1 = arith.constant 0 : i32
    return %c0_i32, %c0_i32_0 : i32, i32
  }
  func.func @transform_7(%arg0: i32) -> (i32, i32) {
    %c0_i32 = arith.constant 0 : i32
    %c0_i32_0 = arith.constant 0 : i32
    %c0_i32_1 = arith.constant 0 : i32
    return %c0_i32, %c0_i32_0 : i32, i32
  }
  func.func @transform_8(%arg0: i32) -> (i32, i32) {
    %c0_i32 = arith.constant 0 : i32
    %c0_i32_0 = arith.constant 0 : i32
    return %arg0, %c0_i32 : i32, i32
  }
  func.func @transform_9(%arg0: i32) -> (i32, i32) {
    %c0_i32 = arith.constant 0 : i32
    %c0_i32_0 = arith.constant 0 : i32
    return %arg0, %c0_i32 : i32, i32
  }
}

module attributes {stable_mosaic.version = 11 : i64} {
  func.func @lc_kernel(%arg0: i32, %arg1: memref<8x256xf32, #tpu.memory_space<vmem>>, %arg2: memref<8x16xf32, #tpu.memory_space<vmem>>, %arg3: memref<8x4xf32, #tpu.memory_space<vmem>>, %arg4: memref<256x128xf32, #tpu.memory_space<vmem>>, %arg5: memref<128x128xf32, #tpu.memory_space<vmem>>, %arg6: memref<16x128xf32, #tpu.memory_space<vmem>>, %arg7: memref<4x128xf32, #tpu.memory_space<vmem>>, %arg8: memref<1x128xf32, #tpu.memory_space<vmem>>, %arg9: memref<8x128xf32, #tpu.memory_space<vmem>>, %arg10: memref<8x1xi32, #tpu.memory_space<vmem>>) attributes {dimension_semantics = [#tpu.dimension_semantics<parallel>], iteration_bounds = array<i64: 2>, scalar_prefetch = 0 : i64, scratch_operands = 0 : i64, tpu.core_type = #tpu.core_type<tc>, window_params = [{transform_indices = @transform_0, window_bounds = array<i64: 8, 256>}, {transform_indices = @transform_1, window_bounds = array<i64: 8, 16>}, {transform_indices = @transform_2, window_bounds = array<i64: 8, 4>}, {pipeline_mode = #tpu.pipeline_mode<synchronous>, transform_indices = @transform_3, window_bounds = array<i64: 256, 128>}, {pipeline_mode = #tpu.pipeline_mode<synchronous>, transform_indices = @transform_4, window_bounds = array<i64: 128, 128>}, {pipeline_mode = #tpu.pipeline_mode<synchronous>, transform_indices = @transform_5, window_bounds = array<i64: 16, 128>}, {pipeline_mode = #tpu.pipeline_mode<synchronous>, transform_indices = @transform_6, window_bounds = array<i64: 4, 128>}, {pipeline_mode = #tpu.pipeline_mode<synchronous>, transform_indices = @transform_7, window_bounds = array<i64: 1, 128>}, {transform_indices = @transform_8, window_bounds = array<i64: 8, 128>}, {transform_indices = @transform_9, window_bounds = array<i64: 8, 1>}]} {
    %c0 = arith.constant 0 : index
    %c0_0 = arith.constant 0 : index
    %0 = vector.load %arg3[%c0, %c0_0] : memref<8x4xf32, #tpu.memory_space<vmem>>, vector<8x4xf32>
    %c0_1 = arith.constant 0 : index
    %c0_2 = arith.constant 0 : index
    %1 = vector.load %arg7[%c0_1, %c0_2] : memref<4x128xf32, #tpu.memory_space<vmem>>, vector<4x128xf32>
    %c0_3 = arith.constant 0 : index
    %c0_4 = arith.constant 0 : index
    %2 = vector.load %arg8[%c0_3, %c0_4] : memref<1x128xf32, #tpu.memory_space<vmem>>, vector<1x128xf32>
    %3 = vector.extract_strided_slice %0 {offsets = [0, 0], sizes = [8, 1], strides = [1, 1]} : vector<8x4xf32> to vector<8x1xf32>
    %4 = vector.extract_strided_slice %1 {offsets = [0, 0], sizes = [1, 128], strides = [1, 1]} : vector<4x128xf32> to vector<1x128xf32>
    %5 = vector.broadcast %3 : vector<8x1xf32> to vector<8x128xf32>
    %6 = vector.broadcast %4 : vector<1x128xf32> to vector<8x128xf32>
    %7 = arith.mulf %5, %6 : vector<8x128xf32>
    %8 = vector.broadcast %2 : vector<1x128xf32> to vector<8x128xf32>
    %9 = arith.addf %8, %7 : vector<8x128xf32>
    %10 = vector.extract_strided_slice %0 {offsets = [0, 1], sizes = [8, 1], strides = [1, 1]} : vector<8x4xf32> to vector<8x1xf32>
    %11 = vector.extract_strided_slice %1 {offsets = [1, 0], sizes = [1, 128], strides = [1, 1]} : vector<4x128xf32> to vector<1x128xf32>
    %12 = vector.broadcast %10 : vector<8x1xf32> to vector<8x128xf32>
    %13 = vector.broadcast %11 : vector<1x128xf32> to vector<8x128xf32>
    %14 = arith.mulf %12, %13 : vector<8x128xf32>
    %15 = arith.addf %9, %14 : vector<8x128xf32>
    %16 = vector.extract_strided_slice %0 {offsets = [0, 2], sizes = [8, 1], strides = [1, 1]} : vector<8x4xf32> to vector<8x1xf32>
    %17 = vector.extract_strided_slice %1 {offsets = [2, 0], sizes = [1, 128], strides = [1, 1]} : vector<4x128xf32> to vector<1x128xf32>
    %18 = vector.broadcast %16 : vector<8x1xf32> to vector<8x128xf32>
    %19 = vector.broadcast %17 : vector<1x128xf32> to vector<8x128xf32>
    %20 = arith.mulf %18, %19 : vector<8x128xf32>
    %21 = arith.addf %15, %20 : vector<8x128xf32>
    %22 = vector.extract_strided_slice %0 {offsets = [0, 3], sizes = [8, 1], strides = [1, 1]} : vector<8x4xf32> to vector<8x1xf32>
    %23 = vector.extract_strided_slice %1 {offsets = [3, 0], sizes = [1, 128], strides = [1, 1]} : vector<4x128xf32> to vector<1x128xf32>
    %24 = vector.broadcast %22 : vector<8x1xf32> to vector<8x128xf32>
    %25 = vector.broadcast %23 : vector<1x128xf32> to vector<8x128xf32>
    %26 = arith.mulf %24, %25 : vector<8x128xf32>
    %27 = arith.addf %21, %26 : vector<8x128xf32>
    %cst = arith.constant 0.000000e+00 : f32
    %28 = vector.broadcast %cst : f32 to vector<8x128xf32>
    %29 = arith.maximumf %27, %28 : vector<8x128xf32>
    %c0_5 = arith.constant 0 : index
    %c0_6 = arith.constant 0 : index
    %30 = vector.load %arg2[%c0_5, %c0_6] : memref<8x16xf32, #tpu.memory_space<vmem>>, vector<8x16xf32>
    %cst_7 = arith.constant dense<0xFF800000> : vector<8xf32>
    %31 = vector.multi_reduction <maximumf>, %30, %cst_7 [1] : vector<8x16xf32> to vector<8xf32>
    %32 = vector.shape_cast %31 : vector<8xf32> to vector<8x1xf32>
    %33 = vector.broadcast %32 : vector<8x1xf32> to vector<8x16xf32>
    %34 = arith.subf %30, %33 : vector<8x16xf32>
    %35 = math.exp %34 : vector<8x16xf32>
    %cst_8 = arith.constant dense<0.000000e+00> : vector<8xf32>
    %36 = vector.multi_reduction <add>, %35, %cst_8 [1] : vector<8x16xf32> to vector<8xf32>
    %37 = vector.shape_cast %36 : vector<8xf32> to vector<8x1xf32>
    %38 = tpu.reciprocal %37 {approx = true} : vector<8x1xf32> -> vector<8x1xf32>
    %39 = vector.broadcast %38 : vector<8x1xf32> to vector<8x16xf32>
    %40 = arith.mulf %35, %39 : vector<8x16xf32>
    %c0_9 = arith.constant 0 : index
    %c0_10 = arith.constant 0 : index
    %41 = vector.load %arg1[%c0_9, %c0_10] : memref<8x256xf32, #tpu.memory_space<vmem>>, vector<8x256xf32>
    %c0_11 = arith.constant 0 : index
    %c0_12 = arith.constant 0 : index
    %42 = vector.load %arg4[%c0_11, %c0_12] : memref<256x128xf32, #tpu.memory_space<vmem>>, vector<256x128xf32>
    %cst_13 = arith.constant dense<0.000000e+00> : vector<8x128xf32>
    %43 = tpu.matmul %41, %42, %cst_13 {dimension_numbers = #tpu.dot_dimension_numbers<[1], [0], [0], [1], [0, 0, 1, 1], [], []>} : vector<8x256xf32>, vector<256x128xf32>, vector<8x128xf32> -> vector<8x128xf32>
    %c0_14 = arith.constant 0 : index
    %c0_15 = arith.constant 0 : index
    %44 = vector.load %arg5[%c0_14, %c0_15] : memref<128x128xf32, #tpu.memory_space<vmem>>, vector<128x128xf32>
    %cst_16 = arith.constant dense<0.000000e+00> : vector<8x128xf32>
    %45 = tpu.matmul %29, %44, %cst_16 {dimension_numbers = #tpu.dot_dimension_numbers<[1], [0], [0], [1], [0, 0, 1, 1], [], []>} : vector<8x128xf32>, vector<128x128xf32>, vector<8x128xf32> -> vector<8x128xf32>
    %46 = arith.addf %43, %45 : vector<8x128xf32>
    %c0_17 = arith.constant 0 : index
    %c0_18 = arith.constant 0 : index
    %47 = vector.load %arg6[%c0_17, %c0_18] : memref<16x128xf32, #tpu.memory_space<vmem>>, vector<16x128xf32>
    %cst_19 = arith.constant dense<0.000000e+00> : vector<8x128xf32>
    %48 = tpu.matmul %40, %47, %cst_19 {dimension_numbers = #tpu.dot_dimension_numbers<[1], [0], [0], [1], [0, 0, 1, 1], [], []>} : vector<8x16xf32>, vector<16x128xf32>, vector<8x128xf32> -> vector<8x128xf32>
    %49 = arith.addf %46, %48 : vector<8x128xf32>
    %c0_20 = arith.constant 0 : index
    %c0_21 = arith.constant 0 : index
    %50 = vector.load %arg9[%c0_20, %c0_21] : memref<8x128xf32, #tpu.memory_space<vmem>>, vector<8x128xf32>
    tpu.vector_store %arg9[%c0_20, %c0_21], %49 {strides = array<i32>} : memref<8x128xf32, #tpu.memory_space<vmem>>, vector<8x128xf32>,
    %51 = tpu.iota {dimensions = array<i32: 1>} : vector<8x128xi32>
    %c1_i32 = arith.constant 1 : i32
    %52 = vector.broadcast %c1_i32 : i32 to vector<8x128xi32>
    %53 = arith.cmpi sge, %51, %52 : vector<8x128xi32>
    %c16_i32 = arith.constant 16 : i32
    %54 = vector.broadcast %c16_i32 : i32 to vector<8x128xi32>
    %55 = arith.cmpi slt, %51, %54 : vector<8x128xi32>
    %56 = arith.andi %53, %55 : vector<8x128xi1>
    %cst_22 = arith.constant 0xFF800000 : f32
    %57 = vector.broadcast %cst_22 : f32 to vector<8x128xf32>
    %58 = arith.select %56, %49, %57 : vector<8x128xi1>, vector<8x128xf32>
    %cst_23 = arith.constant dense<0xFF800000> : vector<8xf32>
    %59 = vector.multi_reduction <maximumf>, %58, %cst_23 [1] : vector<8x128xf32> to vector<8xf32>
    %60 = vector.shape_cast %59 : vector<8xf32> to vector<8x1xf32>
    %61 = vector.broadcast %60 : vector<8x1xf32> to vector<8x128xf32>
    %62 = arith.cmpf oeq, %58, %61 : vector<8x128xf32>
    %63 = arith.andi %62, %56 : vector<8x128xi1>
    %c128_i32 = arith.constant 128 : i32
    %64 = vector.broadcast %c128_i32 : i32 to vector<8x128xi32>
    %65 = arith.select %63, %51, %64 : vector<8x128xi1>, vector<8x128xi32>
    %cst_24 = arith.constant dense<2147483647> : vector<8xi32>
    %66 = vector.multi_reduction <minsi>, %65, %cst_24 [1] : vector<8x128xi32> to vector<8xi32>
    %67 = vector.shape_cast %66 : vector<8xi32> to vector<8x1xi32>
    %c0_25 = arith.constant 0 : index
    %c0_26 = arith.constant 0 : index
    %68 = vector.load %arg10[%c0_25, %c0_26] : memref<8x1xi32, #tpu.memory_space<vmem>>, vector<8x1xi32>
    tpu.vector_store %arg10[%c0_25, %c0_26], %67 {strides = array<i32>} : memref<8x1xi32, #tpu.memory_space<vmem>>, vector<8x1xi32>,
    return
  }
  func.func @transform_0(%arg0: i32) -> (i32, i32) {
    %c0_i32 = arith.constant 0 : i32
    %c0_i32_0 = arith.constant 0 : i32
    return %arg0, %c0_i32 : i32, i32
  }
  func.func @transform_1(%arg0: i32) -> (i32, i32) {
    %c0_i32 = arith.constant 0 : i32
    %c0_i32_0 = arith.constant 0 : i32
    return %arg0, %c0_i32 : i32, i32
  }
  func.func @transform_2(%arg0: i32) -> (i32, i32) {
    %c0_i32 = arith.constant 0 : i32
    %c0_i32_0 = arith.constant 0 : i32
    return %arg0, %c0_i32 : i32, i32
  }
  func.func @transform_3(%arg0: i32) -> (i32, i32) {
    %c0_i32 = arith.constant 0 : i32
    %c0_i32_0 = arith.constant 0 : i32
    %c0_i32_1 = arith.constant 0 : i32
    return %c0_i32, %c0_i32_0 : i32, i32
  }
  func.func @transform_4(%arg0: i32) -> (i32, i32) {
    %c0_i32 = arith.constant 0 : i32
    %c0_i32_0 = arith.constant 0 : i32
    %c0_i32_1 = arith.constant 0 : i32
    return %c0_i32, %c0_i32_0 : i32, i32
  }
  func.func @transform_5(%arg0: i32) -> (i32, i32) {
    %c0_i32 = arith.constant 0 : i32
    %c0_i32_0 = arith.constant 0 : i32
    %c0_i32_1 = arith.constant 0 : i32
    return %c0_i32, %c0_i32_0 : i32, i32
  }
  func.func @transform_6(%arg0: i32) -> (i32, i32) {
    %c0_i32 = arith.constant 0 : i32
    %c0_i32_0 = arith.constant 0 : i32
    %c0_i32_1 = arith.constant 0 : i32
    return %c0_i32, %c0_i32_0 : i32, i32
  }
  func.func @transform_7(%arg0: i32) -> (i32, i32) {
    %c0_i32 = arith.constant 0 : i32
    %c0_i32_0 = arith.constant 0 : i32
    %c0_i32_1 = arith.constant 0 : i32
    return %c0_i32, %c0_i32_0 : i32, i32
  }
  func.func @transform_8(%arg0: i32) -> (i32, i32) {
    %c0_i32 = arith.constant 0 : i32
    %c0_i32_0 = arith.constant 0 : i32
    return %arg0, %c0_i32 : i32, i32
  }
  func.func @transform_9(%arg0: i32) -> (i32, i32) {
    %c0_i32 = arith.constant 0 : i32
    %c0_i32_0 = arith.constant 0 : i32
    return %arg0, %c0_i32 : i32, i32
  }
}

</mosaic_0001>

<llo_original>
// kernel: lc_forward.1
$region0: #{lc_forward.1}
  #allocation0 [shape = 'u32[]', space=smem, size = 0x4, offset = 0x4, fixed_abs, tag = 'smem constant byte address 0x4 - core index']
  #allocation1 [shape = 'u32[144,128]{1,0:T(1,128)}', space=vmem, size = 0x12000, scoped, tag = 'internal scratch']
  %s0 = inlined_call_operand.hbm [shape: f32[16,256], index: 0, kind: input, shape index: {}]
  %s1 = inlined_call_operand.vmem [shape: f32[16,16], index: 1, kind: input, shape index: {}]
  %s2 = inlined_call_operand.vmem [shape: f32[16,4], index: 2, kind: input, shape index: {}]
  %s3 = inlined_call_operand.hbm [shape: f32[256,128], index: 3, kind: input, shape index: {}]
  %s4 = inlined_call_operand.hbm [shape: f32[128,128], index: 4, kind: input, shape index: {}]
  %s5 = inlined_call_operand.vmem [shape: f32[16,128], index: 5, kind: input, shape index: {}]
  %s6 = inlined_call_operand.hbm [shape: f32[4,128], index: 6, kind: input, shape index: {}]
  %s7 = inlined_call_operand.vmem [shape: f32[1,128], index: 7, kind: input, shape index: {}]
  %s8 = inlined_call_operand.hbm [shape: f32[16,128], index: 8, kind: output, shape index: {0}]
  %s9 = inlined_call_operand.vmem [shape: s32[16,1], index: 9, kind: output, shape index: {1}]
  %10 = xla_tuple %s8, %s9
  %s11 = sld [smem:[#allocation0]]
  $region89: #{lc_forward.1} parent=0
    _
  %s13 = ssub.s32 1, %s11
  %s14 = scalar_select 0, %s13, %s11
  $region1: #{lc_forward.1} parent=0
    #allocation2 [shape = 'u8[16384]{0}', space=vmem, size = 0x4000, scoped, tag = 'input window, operand 0']
    #allocation3 [shape = 's32[2]{0}', space=sflag, size = 0x8, scoped, tag = 'scoped memory for lc_forward.1']
    #allocation4 [shape = 's32[2]{0}', space=sflag, size = 0x8, scoped, tag = 'scoped memory for lc_forward.1']
    #allocation5 [shape = 'u8[131072]{0}', space=vmem, size = 0x20000, scoped, tag = 'input window, operand 3, single buffered']
    #allocation6 [shape = 's32[1]{0}', space=sflag, size = 0x4, scoped, tag = 'scoped memory for lc_forward.1']
    #allocation7 [shape = 'u8[65536]{0}', space=vmem, size = 0x10000, scoped, tag = 'input window, operand 4, single buffered']
    #allocation8 [shape = 'u8[2048]{0}', space=vmem, size = 0x800, scoped, tag = 'input window, operand 6, single buffered']
    #allocation9 [shape = 's32[1]{0}', space=sflag, size = 0x4, scoped, tag = 'scoped memory for lc_forward.1']
    #allocation10 [shape = 'u8[8192]{0}', space=vmem, size = 0x2000, scoped, tag = 'output window, operand 0']
    %15 = vsyncpa [#allocation3], 0
    %s16 = scalar_lea.sflag [#allocation3], 1
    %17 = vsyncpa %s16, 0
    %18 = vsyncpa [#allocation6], 0
    %19 = vsyncpa [#allocation9], 0
    %20 = vsyncpa [#allocation4], 0
    %s21 = scalar_lea.sflag [#allocation4], 1
    %22 = vsyncpa %s21, 0
    loop: start=0, step=1, limit=4
    $region2: #{lc_forward.1} parent=1 // loop_pre_header
      _
    $region3: #{lc_forward.1} parent=1 // loop_header
      %s24 = sphi 0, %s28
      %p25 = scmp.ge.s32.totalorder %s24, 4
      %s34 = sphi 0, %s36
      %s37 = sphi 0, %s34
      %s38 = sphi 0, %s37
      %s54 = sphi 0, %s38
      %s60 = sphi 0, %s62
      %s63 = sphi 0, %s60
      %s64 = sphi 0, %s63
      %s80 = sphi 0, %s64
      %s86 = sphi 0, %s88
      %s89 = sphi 0, %s86
      %s90 = sphi 0, %s89
      %s106 = sphi 0, %s90
      %s110 = sphi 0, %s110
      %s112 = sphi 0, %s110
      %s113 = sphi 0, %s112
      %s127 = sphi 0, %s113
      %s131 = sphi 0, %s131
      %s133 = sphi 0, %s131
      %s134 = sphi 0, %s133
      %s148 = sphi 0, %s134
      %s152 = sphi 0, %s152
      %s154 = sphi 0, %s152
      %s155 = sphi 0, %s154
      %s169 = sphi 0, %s155
      %s173 = sphi 0, %s173
      %s175 = sphi 0, %s173
      %s176 = sphi 0, %s175
      %s190 = sphi 0, %s176
      %s194 = sphi 0, %s194
      %s196 = sphi 0, %s194
      %s197 = sphi 0, %s196
      %s211 = sphi 0, %s197
      %s217 = sphi 0, %s219
      %s220 = sphi 0, %s217
      %s221 = sphi 0, %s220
      %s237 = sphi 0, %s221
      %s243 = sphi 0, %s245
      %s246 = sphi 0, %s243
      %s247 = sphi 0, %s246
      %s263 = sphi 0, %s247
    $region4: #{lc_forward.1} parent=1 // loop_header_branch
      %27 = sbr.rel (%p25) target = $region8
    $region5: #{lc_forward.1} parent=1 // loop_body
      %s29 = ssub.s32 %s24, 1
      %s30 = ssub.s32 %s24, 2
      %s31 = sadd.s32 %s24, 1
      %s32 = ssub.s32 %s24, %s31
      %p33 = scmp.eq.s32.totalorder %s32, 0
      %s35 = sadd.s32 %s34, 1
      %s36 = scalar_select %p33, %s34, %s35
      %p39 = pneg %p33
      %p40 = scmp.eq.s32.totalorder %s24, 1
      %p41 = por %p39, %p40
      %p42 = scmp.ne.s32.totalorder %s34, %s37
      %p43 = scmp.eq.s32.totalorder %s24, 0
      %p44 = por %p42, %p43
      %p45 = scmp.ne.s32.totalorder %s34, %s37
      %p46 = scmp.eq.s32.totalorder %s29, 1
      %p47 = por %p45, %p46
      %p48 = scmp.ne.s32.totalorder %s37, %s38
      %p49 = scmp.eq.s32.totalorder %s29, 0
      %p50 = por %p48, %p49
      %p51 = scmp.ne.s32.totalorder %s37, %s38
      %p52 = scmp.eq.s32.totalorder %s30, 1
      %p53 = por %p51, %p52
      %p55 = scmp.ne.s32.totalorder %s38, %s54
      %p56 = scmp.eq.s32.totalorder %s30, 0
      %p57 = por %p55, %p56
      %s58 = ssub.s32 %s24, %s31
      %p59 = scmp.eq.s32.totalorder %s58, 0
      %s61 = sadd.s32 %s60, 1
      %s62 = scalar_select %p59, %s60, %s61
      %p65 = pneg %p59
      %p66 = scmp.eq.s32.totalorder %s24, 1
      %p67 = por %p65, %p66
      %p68 = scmp.ne.s32.totalorder %s60, %s63
      %p69 = scmp.eq.s32.totalorder %s24, 0
      %p70 = por %p68, %p69
      %p71 = scmp.ne.s32.totalorder %s60, %s63
      %p72 = scmp.eq.s32.totalorder %s29, 1
      %p73 = por %p71, %p72
      %p74 = scmp.ne.s32.totalorder %s63, %s64
      %p75 = scmp.eq.s32.totalorder %s29, 0
      %p76 = por %p74, %p75
      %p77 = scmp.ne.s32.totalorder %s63, %s64
      %p78 = scmp.eq.s32.totalorder %s30, 1
      %p79 = por %p77, %p78
      %p81 = scmp.ne.s32.totalorder %s64, %s80
      %p82 = scmp.eq.s32.totalorder %s30, 0
      %p83 = por %p81, %p82
      %s84 = ssub.s32 %s24, %s31
      %p85 = scmp.eq.s32.totalorder %s84, 0
      %s87 = sadd.s32 %s86, 1
      %s88 = scalar_select %p85, %s86, %s87
      %p91 = pneg %p85
      %p92 = scmp.eq.s32.totalorder %s24, 1
      %p93 = por %p91, %p92
      %p94 = scmp.ne.s32.totalorder %s86, %s89
      %p95 = scmp.eq.s32.totalorder %s24, 0
      %p96 = por %p94, %p95
      %p97 = scmp.ne.s32.totalorder %s86, %s89
      %p98 = scmp.eq.s32.totalorder %s29, 1
      %p99 = por %p97, %p98
      %p100 = scmp.ne.s32.totalorder %s89, %s90
      %p101 = scmp.eq.s32.totalorder %s29, 0
      %p102 = por %p100, %p101
      %p103 = scmp.ne.s32.totalorder %s89, %s90
      %p104 = scmp.eq.s32.totalorder %s30, 1
      %p105 = por %p103, %p104
      %p107 = scmp.ne.s32.totalorder %s90, %s106
      %p108 = scmp.eq.s32.totalorder %s30, 0
      %p109 = por %p107, %p108
      %s111 = sadd.s32 %s110, 1
      %p114 = scmp.eq.s32.totalorder %s24, 1
      %p115 = scmp.ne.s32.totalorder %s110, %s112
      %p116 = scmp.eq.s32.totalorder %s24, 0
      %p117 = por %p115, %p116
      %p118 = scmp.ne.s32.totalorder %s110, %s112
      %p119 = scmp.eq.s32.totalorder %s29, 1
      %p120 = por %p118, %p119
      %p121 = scmp.ne.s32.totalorder %s112, %s113
      %p122 = scmp.eq.s32.totalorder %s29, 0
      %p123 = por %p121, %p122
      %p124 = scmp.ne.s32.totalorder %s112, %s113
      %p125 = scmp.eq.s32.totalorder %s30, 1
      %p126 = por %p124, %p125
      %p128 = scmp.ne.s32.totalorder %s113, %s127
      %p129 = scmp.eq.s32.totalorder %s30, 0
      %p130 = por %p128, %p129
      %s132 = sadd.s32 %s131, 1
      %p135 = scmp.eq.s32.totalorder %s24, 1
      %p136 = scmp.ne.s32.totalorder %s131, %s133
      %p137 = scmp.eq.s32.totalorder %s24, 0
      %p138 = por %p136, %p137
      %p139 = scmp.ne.s32.totalorder %s131, %s133
      %p140 = scmp.eq.s32.totalorder %s29, 1
      %p141 = por %p139, %p140
      %p142 = scmp.ne.s32.totalorder %s133, %s134
      %p143 = scmp.eq.s32.totalorder %s29, 0
      %p144 = por %p142, %p143
      %p145 = scmp.ne.s32.totalorder %s133, %s134
      %p146 = scmp.eq.s32.totalorder %s30, 1
      %p147 = por %p145, %p146
      %p149 = scmp.ne.s32.totalorder %s134, %s148
      %p150 = scmp.eq.s32.totalorder %s30, 0
      %p151 = por %p149, %p150
      %s153 = sadd.s32 %s152, 1
      %p156 = scmp.eq.s32.totalorder %s24, 1
      %p157 = scmp.ne.s32.totalorder %s152, %s154
      %p158 = scmp.eq.s32.totalorder %s24, 0
      %p159 = por %p157, %p158
      %p160 = scmp.ne.s32.totalorder %s152, %s154
      %p161 = scmp.eq.s32.totalorder %s29, 1
      %p162 = por %p160, %p161
      %p163 = scmp.ne.s32.totalorder %s154, %s155
      %p164 = scmp.eq.s32.totalorder %s29, 0
      %p165 = por %p163, %p164
      %p166 = scmp.ne.s32.totalorder %s154, %s155
      %p167 = scmp.eq.s32.totalorder %s30, 1
      %p168 = por %p166, %p167
      %p170 = scmp.ne.s32.totalorder %s155, %s169
      %p171 = scmp.eq.s32.totalorder %s30, 0
      %p172 = por %p170, %p171
      %s174 = sadd.s32 %s173, 1
      %p177 = scmp.eq.s32.totalorder %s24, 1
      %p178 = scmp.ne.s32.totalorder %s173, %s175
      %p179 = scmp.eq.s32.totalorder %s24, 0
      %p180 = por %p178, %p179
      %p181 = scmp.ne.s32.totalorder %s173, %s175
      %p182 = scmp.eq.s32.totalorder %s29, 1
      %p183 = por %p181, %p182
      %p184 = scmp.ne.s32.totalorder %s175, %s176
      %p185 = scmp.eq.s32.totalorder %s29, 0
      %p186 = por %p184, %p185
      %p187 = scmp.ne.s32.totalorder %s175, %s176
      %p188 = scmp.eq.s32.totalorder %s30, 1
      %p189 = por %p187, %p188
      %p191 = scmp.ne.s32.totalorder %s176, %s190
      %p192 = scmp.eq.s32.totalorder %s30, 0
      %p193 = por %p191, %p192
      %s195 = sadd.s32 %s194, 1
      %p198 = scmp.eq.s32.totalorder %s24, 1
      %p199 = scmp.ne.s32.totalorder %s194, %s196
      %p200 = scmp.eq.s32.totalorder %s24, 0
      %p201 = por %p199, %p200
      %p202 = scmp.ne.s32.totalorder %s194, %s196
      %p203 = scmp.eq.s32.totalorder %s29, 1
      %p204 = por %p202, %p203
      %p205 = scmp.ne.s32.totalorder %s196, %s197
      %p206 = scmp.eq.s32.totalorder %s29, 0
      %p207 = por %p205, %p206
      %p208 = scmp.ne.s32.totalorder %s196, %s197
      %p209 = scmp.eq.s32.totalorder %s30, 1
      %p210 = por %p208, %p209
      %p212 = scmp.ne.s32.totalorder %s197, %s211
      %p213 = scmp.eq.s32.totalorder %s30, 0
      %p214 = por %p212, %p213
      %s215 = ssub.s32 %s24, %s31
      %p216 = scmp.eq.s32.totalorder %s215, 0
      %s218 = sadd.s32 %s217, 1
      %s219 = scalar_select %p216, %s217, %s218
      %p222 = pneg %p216
      %p223 = scmp.eq.s32.totalorder %s24, 1
      %p224 = por %p222, %p223
      %p225 = scmp.ne.s32.totalorder %s217, %s220
      %p226 = scmp.eq.s32.totalorder %s24, 0
      %p227 = por %p225, %p226
      %p228 = scmp.ne.s32.totalorder %s217, %s220
      %p229 = scmp.eq.s32.totalorder %s29, 1
      %p230 = por %p228, %p229
      %p231 = scmp.ne.s32.totalorder %s220, %s221
      %p232 = scmp.eq.s32.totalorder %s29, 0
      %p233 = por %p231, %p232
      %p234 = scmp.ne.s32.totalorder %s220, %s221
      %p235 = scmp.eq.s32.totalorder %s30, 1
      %p236 = por %p234, %p235
      %p238 = scmp.ne.s32.totalorder %s221, %s237
      %p239 = scmp.eq.s32.totalorder %s30, 0
      %p240 = por %p238, %p239
      %s241 = ssub.s32 %s24, %s31
      %p242 = scmp.eq.s32.totalorder %s241, 0
      %s244 = sadd.s32 %s243, 1
      %s245 = scalar_select %p242, %s243, %s244
      %p248 = pneg %p242
      %p249 = scmp.eq.s32.totalorder %s24, 1
      %p250 = por %p248, %p249
      %p251 = scmp.ne.s32.totalorder %s243, %s246
      %p252 = scmp.eq.s32.totalorder %s24, 0
      %p253 = por %p251, %p252
      %p254 = scmp.ne.s32.totalorder %s243, %s246
      %p255 = scmp.eq.s32.totalorder %s29, 1
      %p256 = por %p254, %p255
      %p257 = scmp.ne.s32.totalorder %s246, %s247
      %p258 = scmp.eq.s32.totalorder %s29, 0
      %p259 = por %p257, %p258
      %p260 = scmp.ne.s32.totalorder %s246, %s247
      %p261 = scmp.eq.s32.totalorder %s30, 1
      %p262 = por %p260, %p261
      %p264 = scmp.ne.s32.totalorder %s247, %s263
      %p265 = scmp.eq.s32.totalorder %s30, 0
      %p266 = por %p264, %p265
      %p267 = scmp.le.s32.totalorder 1, %s24
      %p268 = scmp.lt.s32.totalorder %s24, 3
      %p269 = pnand %p267, %p268
      %p270 = pneg %p269
      // Predicated region
      $region9: #{lc_forward.1} parent=5 // pred_check
        _
      $region10: #{lc_forward.1} parent=5 // pred_check_branch
        %272 = sbr.rel (%p269) target = $region12
      $region11: #{lc_forward.1} parent=5 // pred_region
        %s273 = ssub.s32 %s24, 1
        // Predicated region
        $region13: #{lc_forward.1} parent=11 // pred_check
          %p274 = pneg %p123
        $region14: #{lc_forward.1} parent=11 // pred_check_branch
          %276 = sbr.rel (%p274) target = $region16
        $region15: #{lc_forward.1} parent=11 // pred_region
          %s278 = ssub.s32 4096, 4096
          %279 = vsyncadd [#allocation6], %s278
          %s280 = sshll.u32 [#allocation5], 4
          %s281 = int_to_ptr.vmem [resolvable:$true] %s280
          %286 = dma.hbm_to_vmem [thread:$0]  %s3, 4096, %s281, [#allocation6], 128, 128, 8
        $region16: #{lc_forward.1} parent=11 // pred_fallthru
          _
        // Predicated region
        $region17: #{lc_forward.1} parent=11 // pred_check
          %p287 = pneg %p144
        $region18: #{lc_forward.1} parent=11 // pred_check_branch
          %289 = sbr.rel (%p287) target = $region20
        $region19: #{lc_forward.1} parent=11 // pred_region
          %s291 = ssub.s32 2048, 2048
          %292 = vsyncadd [#allocation6], %s291
          %s293 = sshll.u32 [#allocation7], 4
          %s294 = int_to_ptr.vmem [resolvable:$true] %s293
          %299 = dma.hbm_to_vmem [thread:$0]  %s4, 2048, %s294, [#allocation6], 128, 128, 8
        $region20: #{lc_forward.1} parent=11 // pred_fallthru
          _
        // Predicated region
        $region21: #{lc_forward.1} parent=11 // pred_check
          %p300 = pneg %p165
        $region22: #{lc_forward.1} parent=11 // pred_check_branch
          %302 = sbr.rel (%p300) target = $region24
        $region23: #{lc_forward.1} parent=11 // pred_region
          _
        $region24: #{lc_forward.1} parent=11 // pred_fallthru
          _
        // Predicated region
        $region25: #{lc_forward.1} parent=11 // pred_check
          %p303 = pneg %p186
        $region26: #{lc_forward.1} parent=11 // pred_check_branch
          %305 = sbr.rel (%p303) target = $region28
        $region27: #{lc_forward.1} parent=11 // pred_region
          %s307 = ssub.s32 64, 64
          %308 = vsyncadd [#allocation9], %s307
          %s310 = sshll.u32 [#allocation8], 4
          %s311 = int_to_ptr.vmem [resolvable:$true] %s310
          %313 = dma.hbm_to_vmem [thread:$0]  %s6, 64, %s311, [#allocation9]
        $region28: #{lc_forward.1} parent=11 // pred_fallthru
          _
        // Predicated region
        $region29: #{lc_forward.1} parent=11 // pred_check
          %p314 = pneg %p207
        $region30: #{lc_forward.1} parent=11 // pred_check_branch
          %316 = sbr.rel (%p314) target = $region32
        $region31: #{lc_forward.1} parent=11 // pred_region
          _
        $region32: #{lc_forward.1} parent=11 // pred_fallthru
          _
      $region12: #{lc_forward.1} parent=5 // pred_fallthru
        _
      %p317 = scmp.lt.s32.totalorder %s24, 2
      // Predicated region
      $region33: #{lc_forward.1} parent=5 // pred_check
        %p318 = pneg %p317
      $region34: #{lc_forward.1} parent=5 // pred_check_branch
        %320 = sbr.rel (%p318) target = $region36
      $region35: #{lc_forward.1} parent=5 // pred_region
        // Predicated region
        $region37: #{lc_forward.1} parent=35 // pred_check
          %p321 = pneg %p44
        $region38: #{lc_forward.1} parent=35 // pred_check_branch
          %323 = sbr.rel (%p321) target = $region40
        $region39: #{lc_forward.1} parent=35 // pred_region
          %s324 = sand.u32 %s34, 1
          %s325 = scalar_lea.sflag [#allocation3], %s324
          %s326 = sand.u32 %s34, 1
          %s327 = smul.addr %s326, 16
          %s328 = scalar_lea.vmem [#allocation2], %s327
          %s330 = ssub.s32 256, 256
          %331 = vsyncadd %s325, %s330
          %s332 = smul.addr %s24, 2
          %s333 = smul.addr %s332, 128
          %s334 = scalar_lea.hbm %s0, %s333
          %s336 = sshll.u32 %s328, 4
          %s337 = int_to_ptr.vmem [resolvable:$true] %s336
          %339 = dma.hbm_to_vmem [thread:$0]  %s334, 256, %s337, %s325
        $region40: #{lc_forward.1} parent=35 // pred_fallthru
          _
        // Predicated region
        $region41: #{lc_forward.1} parent=35 // pred_check
          %p340 = pneg %p70
        $region42: #{lc_forward.1} parent=35 // pred_check_branch
          %342 = sbr.rel (%p340) target = $region44
        $region43: #{lc_forward.1} parent=35 // pred_region
          %p343 = scmp.lt.s32.totalorder %s24, 1
          %s344 = scalar_select %p343, %s24, 1
          %s345 = smul.addr %s344, 8
          %s346 = scalar_lea.vmem %s1, %s345
        $region44: #{lc_forward.1} parent=35 // pred_fallthru
          _
        // Predicated region
        $region45: #{lc_forward.1} parent=35 // pred_check
          %p347 = pneg %p96
        $region46: #{lc_forward.1} parent=35 // pred_check_branch
          %349 = sbr.rel (%p347) target = $region48
        $region47: #{lc_forward.1} parent=35 // pred_region
          %p350 = scmp.lt.s32.totalorder %s24, 1
          %s351 = scalar_select %p350, %s24, 1
          %s352 = smul.addr %s351, 8
          %s353 = scalar_lea.vmem %s2, %s352
        $region48: #{lc_forward.1} parent=35 // pred_fallthru
          _
      $region36: #{lc_forward.1} parent=5 // pred_fallthru
        _
      %p354 = scmp.le.s32.totalorder 1, %s24
      %p355 = scmp.lt.s32.totalorder %s24, 3
      %p356 = pnand %p354, %p355
      %p357 = pneg %p356
      // Predicated region
      $region49: #{lc_forward.1} parent=5 // pred_check
        _
      $region50: #{lc_forward.1} parent=5 // pred_check_branch
        %359 = sbr.rel (%p356) target = $region52
      $region51: #{lc_forward.1} parent=5 // pred_region
        %s360 = ssub.s32 %s24, 1
        %s361 = sand.u32 %s37, 1
        %s362 = scalar_lea.sflag [#allocation3], %s361
        %s363 = sand.u32 %s37, 1
        %s364 = smul.addr %s363, 16
        %s365 = scalar_lea.vmem [#allocation2], %s364
        // Predicated region
        $region53: #{lc_forward.1} parent=51 // pred_check
          %p366 = pneg %p50
        $region54: #{lc_forward.1} parent=51 // pred_check_branch
          %368 = sbr.rel (%p366) target = $region56
        $region55: #{lc_forward.1} parent=51 // pred_region
          %369 = dma.done %s362, 256
        $region56: #{lc_forward.1} parent=51 // pred_fallthru
          _
        // Predicated region
        $region57: #{lc_forward.1} parent=51 // pred_check
          %p370 = pneg %p123
        $region58: #{lc_forward.1} parent=51 // pred_check_branch
          %372 = sbr.rel (%p370) target = $region60
        $region59: #{lc_forward.1} parent=51 // pred_region
          %373 = dma.done [#allocation6], 4096
        $region60: #{lc_forward.1} parent=51 // pred_fallthru
          _
        // Predicated region
        $region61: #{lc_forward.1} parent=51 // pred_check
          %p374 = pneg %p144
        $region62: #{lc_forward.1} parent=51 // pred_check_branch
          %376 = sbr.rel (%p374) target = $region64
        $region63: #{lc_forward.1} parent=51 // pred_region
          %377 = dma.done [#allocation6], 2048
        $region64: #{lc_forward.1} parent=51 // pred_fallthru
          _
        // Predicated region
        $region65: #{lc_forward.1} parent=51 // pred_check
          %p378 = pneg %p186
        $region66: #{lc_forward.1} parent=51 // pred_check_branch
          %380 = sbr.rel (%p378) target = $region68
        $region67: #{lc_forward.1} parent=51 // pred_region
          %381 = dma.done [#allocation9], 64
        $region68: #{lc_forward.1} parent=51 // pred_fallthru
          _
        %s382 = sand.u32 %s37, 1
        %s383 = scalar_lea.sflag [#allocation3], %s382
        %s384 = sand.u32 %s37, 1
        %s385 = smul.addr %s384, 16
        %s386 = scalar_lea.vmem [#allocation2], %s385
        %p387 = pneg %p50
        %p388 = pneg %p47
        %p389 = scmp.lt.s32.totalorder %s29, 1
        %s390 = scalar_select %p389, %s29, 1
        %s391 = smul.addr %s390, 8
        %s392 = scalar_lea.vmem %s1, %s391
        %p393 = pneg %p76
        %p394 = pneg %p73
        %p395 = scmp.lt.s32.totalorder %s29, 1
        %s396 = scalar_select %p395, %s29, 1
        %s397 = smul.addr %s396, 8
        %s398 = scalar_lea.vmem %s2, %s397
        %p399 = pneg %p102
        %p400 = pneg %p99
        %p401 = pneg %p123
        %p402 = pneg %p120
        %p403 = pneg %p144
        %p404 = pneg %p141
        %p405 = pneg %p165
        %p406 = pneg %p162
        %p407 = pneg %p186
        %p408 = pneg %p183
        %p409 = pneg %p207
        %p410 = pneg %p204
        %p411 = pneg %p233
        %p412 = pneg %p230
        %s413 = sand.u32 %s220, 1
        %s414 = scalar_lea.sflag [#allocation4], %s413
        %s415 = sand.u32 %s220, 1
        %s416 = smul.addr %s415, 8
        %s417 = scalar_lea.vmem [#allocation10], %s416
        %p418 = pneg %p259
        %p419 = pneg %p256
        %p420 = scmp.lt.s32.totalorder %s29, 1
        %s421 = scalar_select %p420, %s29, 1
        %s422 = smul.addr %s421, 8
        %s423 = scalar_lea.vmem %s9, %s422
        %p424 = scmp.lt.s32.totalorder %s29, 1
        %s425 = scalar_select %p424, %s29, 1
        %s426 = smul.addr %s425, 8
        %s427 = scalar_lea.vmem %s1, %s426
        %p428 = scmp.lt.s32.totalorder %s29, 1
        %s429 = scalar_select %p428, %s29, 1
        %s430 = smul.addr %s429, 8
        %s431 = scalar_lea.vmem %s2, %s430
        %p432 = scmp.lt.s32.totalorder %s29, 1
        %s433 = scalar_select %p432, %s29, 1
        %s434 = smul.addr %s433, 8
        %s435 = scalar_lea.vmem %s9, %s434
        %v436 = vld [vmem:[%s431] sm:$0xff]
        %v437 = vld [vmem:[#allocation8] sm:$0xf]
        %v438 = vld [vmem:[%s7] sm:$0x1]
        %440 = vset.pattern.permute.xlu0 0
        %441 = vperm.xlu0 %440, %v436
        %v442 = vpop.permute.xlu0 %441
        %v444 = vlaneseq
        %v445 = vshrl.u32 %v444, 7
        %v446 = vsub.s32 0, %v445
        %v447 = vrot.slane %v437, %v446
        %v448 = vmul.f32 %v442, %v447
        %v450 = vlaneseq
        %v451 = vshrl.u32 %v450, 7
        %v452 = vsub.s32 0, %v451
        %v453 = vrot.slane %v438, %v452
        %v455 = vadd.f32 %v453, %v448
        %456 = vset.pattern.permute.xlu0 1
        %457 = vperm.xlu0 %456, %v436
        %v458 = vpop.permute.xlu0 %457
        %v460 = vlaneseq
        %v461 = vshrl.u32 %v460, 7
        %v462 = vsub.s32 1, %v461
        %v463 = vrot.slane %v437, %v462
        %v464 = vmul.f32 %v458, %v463
        %v465 = vadd.f32 %v455, %v464
        %466 = vset.pattern.permute.xlu0 2
        %467 = vperm.xlu0 %466, %v436
        %v468 = vpop.permute.xlu0 %467
        %v470 = vlaneseq
        %v471 = vshrl.u32 %v470, 7
        %v472 = vsub.s32 2, %v471
        %v473 = vrot.slane %v437, %v472
        %v474 = vmul.f32 %v468, %v473
        %v475 = vadd.f32 %v465, %v474
        %476 = vset.pattern.permute.xlu0 3
        %477 = vperm.xlu0 %476, %v436
        %v478 = vpop.permute.xlu0 %477
        %v480 = vlaneseq
        %v481 = vshrl.u32 %v480, 7
        %v482 = vsub.s32 3, %v481
        %v483 = vrot.slane %v437, %v482
        %v484 = vmul.f32 %v478, %v483
        %v485 = vadd.f32 %v475, %v484
        %v486 = vmax.f32 %v485, 0.0
        %v487 = vld [vmem:[%s427] sm:$0xff]
        %vm488 = vcmask 130048
        %v489 = vsel %vm488, %v487, -inf
        %490 = vmax.xlane.f32.xlu0 %v489
        %v491 = vpop.xlane.xlu0 %490
        %v492 = vsub.f32 %v487, %v491
        %v493 = vmul.f32 %v492, 1.442695
        %v494 = vpow.pop %v493
        %v495 = vsel %vm488, %v494, 0.0
        %496 = vadd.xlane.f32.xlu0 %v495
        %v497 = vpop.xlane.xlu0 %496
        %v498 = vrcp.pop %v497
        %v499 = vmul.f32 %v494, %v498
        %v500 = vld [vmem:[%s365] sm:$0xff]
        %v501 = vld [vmem:[%s365 + $0x8] sm:$0xff]
        %v502 = vld [vmem:[#allocation5] sm:$0xff]
        %v503 = vld [vmem:[#allocation5 + $0x8] sm:$0xff]
        %v504 = vld [vmem:[#allocation5 + $0x10] sm:$0xff]
        %v505 = vld [vmem:[#allocation5 + $0x18] sm:$0xff]
        %v506 = vld [vmem:[#allocation5 + $0x20] sm:$0xff]
        %v507 = vld [vmem:[#allocation5 + $0x28] sm:$0xff]
        %v508 = vld [vmem:[#allocation5 + $0x30] sm:$0xff]
        %v509 = vld [vmem:[#allocation5 + $0x38] sm:$0xff]
        %v510 = vld [vmem:[#allocation5 + $0x40] sm:$0xff]
        %v511 = vld [vmem:[#allocation5 + $0x48] sm:$0xff]
        %v512 = vld [vmem:[#allocation5 + $0x50] sm:$0xff]
        %v513 = vld [vmem:[#allocation5 + $0x58] sm:$0xff]
        %v514 = vld [vmem:[#allocation5 + $0x60] sm:$0xff]
        %v515 = vld [vmem:[#allocation5 + $0x68] sm:$0xff]
        %v516 = vld [vmem:[#allocation5 + $0x70] sm:$0xff]
        %v517 = vld [vmem:[#allocation5 + $0x78] sm:$0xff]
        %v518 = vld [vmem:[#allocation5 + $0x80] sm:$0xff]
        %v519 = vld [vmem:[#allocation5 + $0x88] sm:$0xff]
        %v520 = vld [vmem:[#allocation5 + $0x90] sm:$0xff]
        %v521 = vld [vmem:[#allocation5 + $0x98] sm:$0xff]
        %v522 = vld [vmem:[#allocation5 + $0xa0] sm:$0xff]
        %v523 = vld [vmem:[#allocation5 + $0xa8] sm:$0xff]
        %v524 = vld [vmem:[#allocation5 + $0xb0] sm:$0xff]
        %v525 = vld [vmem:[#allocation5 + $0xb8] sm:$0xff]
        %v526 = vld [vmem:[#allocation5 + $0xc0] sm:$0xff]
        %v527 = vld [vmem:[#allocation5 + $0xc8] sm:$0xff]
        %v528 = vld [vmem:[#allocation5 + $0xd0] sm:$0xff]
        %v529 = vld [vmem:[#allocation5 + $0xd8] sm:$0xff]
        %v530 = vld [vmem:[#allocation5 + $0xe0] sm:$0xff]
        %v531 = vld [vmem:[#allocation5 + $0xe8] sm:$0xff]
        %v532 = vld [vmem:[#allocation5 + $0xf0] sm:$0xff]
        %v533 = vld [vmem:[#allocation5 + $0xf8] sm:$0xff]
        %v534 = vld [vmem:[#allocation7] sm:$0xff]
        %v535 = vld [vmem:[#allocation7 + $0x8] sm:$0xff]
        %v536 = vld [vmem:[#allocation7 + $0x10] sm:$0xff]
        %v537 = vld [vmem:[#allocation7 + $0x18] sm:$0xff]
        %v538 = vld [vmem:[#allocation7 + $0x20] sm:$0xff]
        %v539 = vld [vmem:[#allocation7 + $0x28] sm:$0xff]
        %v540 = vld [vmem:[#allocation7 + $0x30] sm:$0xff]
        %v541 = vld [vmem:[#allocation7 + $0x38] sm:$0xff]
        %v542 = vld [vmem:[#allocation7 + $0x40] sm:$0xff]
        %v543 = vld [vmem:[#allocation7 + $0x48] sm:$0xff]
        %v544 = vld [vmem:[#allocation7 + $0x50] sm:$0xff]
        %v545 = vld [vmem:[#allocation7 + $0x58] sm:$0xff]
        %v546 = vld [vmem:[#allocation7 + $0x60] sm:$0xff]
        %v547 = vld [vmem:[#allocation7 + $0x68] sm:$0xff]
        %v548 = vld [vmem:[#allocation7 + $0x70] sm:$0xff]
        %v549 = vld [vmem:[#allocation7 + $0x78] sm:$0xff]
        %550 = vmatprep.subr.mxu0 0.0
        %551 = vmatpush1.msra.mxu0 %v534
        %552 = vmatprep.subr.mxu0 0.0
        %553 = vmatpush1.msra.mxu0 %v535
        %554 = vmatprep.subr.mxu0 0.0
        %555 = vmatpush1.msra.mxu0 %v536
        %556 = vmatprep.subr.mxu0 0.0
        %557 = vmatpush1.msra.mxu0 %v537
        %558 = vmatprep.subr.mxu0 0.0
        %559 = vmatpush1.msra.mxu0 %v538
        %560 = vmatprep.subr.mxu0 0.0
        %561 = vmatpush1.msra.mxu0 %v539
        %562 = vmatprep.subr.mxu0 0.0
        %563 = vmatpush1.msra.mxu0 %v540
        %564 = vmatprep.subr.mxu0 0.0
        %565 = vmatpush1.msra.mxu0 %v541
        %566 = vmatprep.subr.mxu0 0.0
        %567 = vmatpush1.msra.mxu0 %v542
        %568 = vmatprep.subr.mxu0 0.0
        %569 = vmatpush1.msra.mxu0 %v543
        %570 = vmatprep.subr.mxu0 0.0
        %571 = vmatpush1.msra.mxu0 %v544
        %572 = vmatprep.subr.mxu0 0.0
        %573 = vmatpush1.msra.mxu0 %v545
        %574 = vmatprep.subr.mxu0 0.0
        %575 = vmatpush1.msra.mxu0 %v546
        %576 = vmatprep.subr.mxu0 0.0
        %577 = vmatpush1.msra.mxu0 %v547
        %578 = vmatprep.subr.mxu0 0.0
        %579 = vmatpush1.msra.mxu0 %v548
        %580 = vmatprep.subr.mxu0 0.0
        %581 = vmatpush1.msra.mxu0 %v549
        %582 = vmatprep.subr.mxu0 0.0
        %583 = vmatpush1.msra.mxu0 0.0
        %584 = vmatprep.subr.mxu0 0.0
        %585 = vmatpush1.msra.mxu0 0.0
        %586 = vmatprep.subr.mxu0 0.0
        %587 = vmatpush1.msra.mxu0 0.0
        %588 = vmatprep.subr.mxu0 0.0
        %589 = vmatpush1.msra.mxu0 0.0
        %590 = vmatprep.subr.mxu0 0.0
        %591 = vmatpush1.msra.mxu0 0.0
        %592 = vmatprep.subr.mxu0 0.0
        %593 = vmatpush1.msra.mxu0 0.0
        %594 = vmatprep.subr.mxu0 0.0
        %595 = vmatpush1.msra.mxu0 0.0
        %596 = vmatprep.subr.mxu0 0.0
        %597 = vmatpush1.msra.mxu0 0.0
        %598 = vmatprep.subr.mxu0 0.0
        %599 = vmatpush1.msra.mxu0 0.0
        %600 = vmatprep.subr.mxu0 0.0
        %601 = vmatpush1.msra.mxu0 0.0
        %602 = vmatprep.subr.mxu0 0.0
        %603 = vmatpush1.msra.mxu0 0.0
        %604 = vmatprep.subr.mxu0 0.0
        %605 = vmatpush1.msra.mxu0 0.0
        %606 = vmatprep.subr.mxu0 0.0
        %607 = vmatpush1.msra.mxu0 0.0
        %608 = vmatprep.subr.mxu0 0.0
        %609 = vmatpush1.msra.mxu0 0.0
        %610 = vmatprep.subr.mxu0 0.0
        %611 = vmatpush1.msra.mxu0 0.0
        %612 = vmatprep.subr.mxu0 0.0
        %613 = vmatpush1.msra.mxu0 0.0
        %614 = vmatprep.mubr.f32.mxu0 0.0
        %615 = vmatmul.mubr.f32.gmra.mrb[0].mxu0 %v486
        %v616 = vpop.f32.mrb[0].mxu0
        %v617 = vadd.f32 0.0, %v616
        %v618 = vpop.f32.mrb[0].mxu0
        %619 = vdwg.mxu0
        %620 = vmatprep.subr.mxu0 0.0
        %621 = vmatpush1.msra.mxu0 %v502
        %622 = vmatprep.subr.mxu0 0.0
        %623 = vmatpush1.msra.mxu0 %v503
        %624 = vmatprep.subr.mxu0 0.0
        %625 = vmatpush1.msra.mxu0 %v504
        %626 = vmatprep.subr.mxu0 0.0
        %627 = vmatpush1.msra.mxu0 %v505
        %628 = vmatprep.subr.mxu0 0.0
        %629 = vmatpush1.msra.mxu0 %v506
        %630 = vmatprep.subr.mxu0 0.0
        %631 = vmatpush1.msra.mxu0 %v507
        %632 = vmatprep.subr.mxu0 0.0
        %633 = vmatpush1.msra.mxu0 %v508
        %634 = vmatprep.subr.mxu0 0.0
        %635 = vmatpush1.msra.mxu0 %v509
        %636 = vmatprep.subr.mxu0 0.0
        %637 = vmatpush1.msra.mxu0 %v510
        %638 = vmatprep.subr.mxu0 0.0
        %639 = vmatpush1.msra.mxu0 %v511
        %640 = vmatprep.subr.mxu0 0.0
        %641 = vmatpush1.msra.mxu0 %v512
        %642 = vmatprep.subr.mxu0 0.0
        %643 = vmatpush1.msra.mxu0 %v513
        %644 = vmatprep.subr.mxu0 0.0
        %645 = vmatpush1.msra.mxu0 %v514
        %646 = vmatprep.subr.mxu0 0.0
        %647 = vmatpush1.msra.mxu0 %v515
        %648 = vmatprep.subr.mxu0 0.0
        %649 = vmatpush1.msra.mxu0 %v516
        %650 = vmatprep.subr.mxu0 0.0
        %651 = vmatpush1.msra.mxu0 %v517
        %652 = vmatprep.subr.mxu0 0.0
        %653 = vmatpush1.msra.mxu0 %v518
        %654 = vmatprep.subr.mxu0 0.0
        %655 = vmatpush1.msra.mxu0 %v519
        %656 = vmatprep.subr.mxu0 0.0
        %657 = vmatpush1.msra.mxu0 %v520
        %658 = vmatprep.subr.mxu0 0.0
        %659 = vmatpush1.msra.mxu0 %v521
        %660 = vmatprep.subr.mxu0 0.0
        %661 = vmatpush1.msra.mxu0 %v522
        %662 = vmatprep.subr.mxu0 0.0
        %663 = vmatpush1.msra.mxu0 %v523
        %664 = vmatprep.subr.mxu0 0.0
        %665 = vmatpush1.msra.mxu0 %v524
        %666 = vmatprep.subr.mxu0 0.0
        %667 = vmatpush1.msra.mxu0 %v525
        %668 = vmatprep.subr.mxu0 0.0
        %669 = vmatpush1.msra.mxu0 %v526
        %670 = vmatprep.subr.mxu0 0.0
        %671 = vmatpush1.msra.mxu0 %v527
        %672 = vmatprep.subr.mxu0 0.0
        %673 = vmatpush1.msra.mxu0 %v528
        %674 = vmatprep.subr.mxu0 0.0
        %675 = vmatpush1.msra.mxu0 %v529
        %676 = vmatprep.subr.mxu0 0.0
        %677 = vmatpush1.msra.mxu0 %v530
        %678 = vmatprep.subr.mxu0 0.0
        %679 = vmatpush1.msra.mxu0 %v531
        %680 = vmatprep.subr.mxu0 0.0
        %681 = vmatpush1.msra.mxu0 %v532
        %682 = vmatprep.subr.mxu0 0.0
        %683 = vmatpush1.msra.mxu0 %v533
        %684 = vmatprep.mubr.f32.mxu0 %v501
        %685 = vmatmul.mubr.f32.gmra.mrb[0].mxu0 %v500
        %v686 = vpop.f32.mrb[0].mxu0
        %v687 = vadd.f32 %v617, %v686
        %v688 = vpop.f32.mrb[0].mxu0
        %689 = vdwg.mxu0
        %v690 = vld [vmem:[%s5] sm:$0xff]
        %v691 = vld [vmem:[%s5 + $0x8] sm:$0xff]
        %v693 = vsel %vm488, %v499, 0
        %695 = vmatprep.subr.mxu0 0.0
        %696 = vmatpush1.msra.mxu0 %v690
        %697 = vmatprep.subr.mxu0 0.0
        %698 = vmatpush1.msra.mxu0 %v691
        %699 = vmatprep.subr.mxu0 0.0
        %700 = vmatpush1.msra.mxu0 0.0
        %701 = vmatprep.subr.mxu0 0.0
        %702 = vmatpush1.msra.mxu0 0.0
        %703 = vmatprep.subr.mxu0 0.0
        %704 = vmatpush1.msra.mxu0 0.0
        %705 = vmatprep.subr.mxu0 0.0
        %706 = vmatpush1.msra.mxu0 0.0
        %707 = vmatprep.subr.mxu0 0.0
        %708 = vmatpush1.msra.mxu0 0.0
        %709 = vmatprep.subr.mxu0 0.0
        %710 = vmatpush1.msra.mxu0 0.0
        %711 = vmatprep.subr.mxu0 0.0
        %712 = vmatpush1.msra.mxu0 0.0
        %713 = vmatprep.subr.mxu0 0.0
        %714 = vmatpush1.msra.mxu0 0.0
        %715 = vmatprep.subr.mxu0 0.0
        %716 = vmatpush1.msra.mxu0 0.0
        %717 = vmatprep.subr.mxu0 0.0
        %718 = vmatpush1.msra.mxu0 0.0
        %719 = vmatprep.subr.mxu0 0.0
        %720 = vmatpush1.msra.mxu0 0.0
        %721 = vmatprep.subr.mxu0 0.0
        %722 = vmatpush1.msra.mxu0 0.0
        %723 = vmatprep.subr.mxu0 0.0
        %724 = vmatpush1.msra.mxu0 0.0
        %725 = vmatprep.subr.mxu0 0.0
        %726 = vmatpush1.msra.mxu0 0.0
        %727 = vmatprep.subr.mxu0 0.0
        %728 = vmatpush1.msra.mxu0 0.0
        %729 = vmatprep.subr.mxu0 0.0
        %730 = vmatpush1.msra.mxu0 0.0
        %731 = vmatprep.subr.mxu0 0.0
        %732 = vmatpush1.msra.mxu0 0.0
        %733 = vmatprep.subr.mxu0 0.0
        %734 = vmatpush1.msra.mxu0 0.0
        %735 = vmatprep.subr.mxu0 0.0
        %736 = vmatpush1.msra.mxu0 0.0
        %737 = vmatprep.subr.mxu0 0.0
        %738 = vmatpush1.msra.mxu0 0.0
        %739 = vmatprep.subr.mxu0 0.0
        %740 = vmatpush1.msra.mxu0 0.0
        %741 = vmatprep.subr.mxu0 0.0
        %742 = vmatpush1.msra.mxu0 0.0
        %743 = vmatprep.subr.mxu0 0.0
        %744 = vmatpush1.msra.mxu0 0.0
        %745 = vmatprep.subr.mxu0 0.0
        %746 = vmatpush1.msra.mxu0 0.0
        %747 = vmatprep.subr.mxu0 0.0
        %748 = vmatpush1.msra.mxu0 0.0
        %749 = vmatprep.subr.mxu0 0.0
        %750 = vmatpush1.msra.mxu0 0.0
        %751 = vmatprep.subr.mxu0 0.0
        %752 = vmatpush1.msra.mxu0 0.0
        %753 = vmatprep.subr.mxu0 0.0
        %754 = vmatpush1.msra.mxu0 0.0
        %755 = vmatprep.subr.mxu0 0.0
        %756 = vmatpush1.msra.mxu0 0.0
        %757 = vmatprep.subr.mxu0 0.0
        %758 = vmatpush1.msra.mxu0 0.0
        %759 = vmatprep.mubr.f32.mxu0 0.0
        %760 = vmatmul.mubr.f32.gmra.mrb[0].mxu0 %v693
        %v761 = vpop.f32.mrb[0].mxu0
        %v762 = vadd.f32 0.0, %v761
        %v763 = vpop.f32.mrb[0].mxu0
        %764 = vdwg.mxu0
        %v765 = vadd.f32 %v687, %v762
        %766 = vst [vmem:[%s417] sm:$0xff] %v765
        %v767 = vlaneseq
        %v768 = vand.u32 %v767, 127
        %vm769 = vcmp.ge.s32.totalorder %v768, 1
        %vm770 = vcmp.lt.s32.totalorder %v768, 16
        %vm771 = vmand %vm769, %vm770
        %v772 = vsel %vm771, %v765, -inf
        %773 = vmax.xlane.f32.xlu0 %v772
        %v774 = vpop.xlane.xlu0 %773
        %vm775 = vcmp.eq.f32.partialorder %v772, %v774
        %vm776 = vmand %vm775, %vm771
        %v777 = vsel %vm776, %v768, 128
        %v778 = vand.u32 %v777, 65535
        %v779 = vshra.s32 %v777, 16
        %v780 = vcvt.s32.f32 %v778
        %v781 = vcvt.s32.f32 %v779
        %782 = vmin.xlane.f32.xlu0 %v781
        %v783 = vpop.xlane.xlu0 %782
        %vm784 = vcmp.eq.f32.partialorder %v781, %v783
        %v785 = vsel %vm784, %v780, inf
        %786 = vmin.xlane.f32.xlu0 %v785
        %v787 = vpop.xlane.xlu0 %786
        %v788 = vcvt.f32.s32 %v787
        %v789 = vcvt.f32.s32 %v783
        %v790 = vshll.u32 %v789, 16
        %v791 = vadd.s32 %v790, %v788
        %vm792 = vcmask 7168
        %793 = vst.msk [vmem:[%s435] sm:$0xff] %vm792, %v791
        %s794 = sand.u32 %s220, 1
        %s795 = scalar_lea.sflag [#allocation4], %s794
        %s796 = sand.u32 %s220, 1
        %s797 = smul.addr %s796, 8
        %s798 = scalar_lea.vmem [#allocation10], %s797
        %p799 = scmp.lt.s32.totalorder %s29, 1
        %s800 = scalar_select %p799, %s29, 1
        %s801 = smul.addr %s800, 8
        %s802 = scalar_lea.vmem %s9, %s801
        // Predicated region
        $region69: #{lc_forward.1} parent=51 // pred_check
          %p803 = pneg %p230
        $region70: #{lc_forward.1} parent=51 // pred_check_branch
          %805 = sbr.rel (%p803) target = $region72
        $region71: #{lc_forward.1} parent=51 // pred_region
          %s807 = ssub.s32 128, 128
          %808 = vsyncadd %s795, %s807
          %s809 = smul.addr %s29, 128
          %s810 = scalar_lea.hbm %s8, %s809
          %s812 = sshll.u32 %s798, 4
          %s813 = int_to_ptr.vmem [resolvable:$true] %s812
          %815 = dma.vmem_to_hbm [thread:$0]  %s813, 128, %s810, %s795
        $region72: #{lc_forward.1} parent=51 // pred_fallthru
          _
        // Predicated region
        $region73: #{lc_forward.1} parent=51 // pred_check
          %p816 = pneg %p256
        $region74: #{lc_forward.1} parent=51 // pred_check_branch
          %818 = sbr.rel (%p816) target = $region76
        $region75: #{lc_forward.1} parent=51 // pred_region
          _
        $region76: #{lc_forward.1} parent=51 // pred_fallthru
          _
      $region52: #{lc_forward.1} parent=5 // pred_fallthru
        _
      %p819 = scmp.le.s32.totalorder 2, %s24
      // Predicated region
      $region77: #{lc_forward.1} parent=5 // pred_check
        %p820 = pneg %p819
      $region78: #{lc_forward.1} parent=5 // pred_check_branch
        %822 = sbr.rel (%p820) target = $region80
      $region79: #{lc_forward.1} parent=5 // pred_region
        %s823 = ssub.s32 %s24, 2
        // Predicated region
        $region81: #{lc_forward.1} parent=79 // pred_check
          %p824 = pneg %p236
        $region82: #{lc_forward.1} parent=79 // pred_check_branch
          %826 = sbr.rel (%p824) target = $region84
        $region83: #{lc_forward.1} parent=79 // pred_region
          %s827 = sand.u32 %s221, 1
          %s828 = scalar_lea.sflag [#allocation4], %s827
          %s829 = sand.u32 %s221, 1
          %s830 = smul.addr %s829, 8
          %s831 = scalar_lea.vmem [#allocation10], %s830
          %832 = dma.done %s828, 128
        $region84: #{lc_forward.1} parent=79 // pred_fallthru
          _
        // Predicated region
        $region85: #{lc_forward.1} parent=79 // pred_check
          %p833 = pneg %p262
        $region86: #{lc_forward.1} parent=79 // pred_check_branch
          %835 = sbr.rel (%p833) target = $region88
        $region87: #{lc_forward.1} parent=79 // pred_region
          %p836 = scmp.lt.s32.totalorder %s30, 1
          %s837 = scalar_select %p836, %s30, 1
          %s838 = smul.addr %s837, 8
          %s839 = scalar_lea.vmem %s9, %s838
        $region88: #{lc_forward.1} parent=79 // pred_fallthru
          _
      $region80: #{lc_forward.1} parent=5 // pred_fallthru
        _
    $region6: #{lc_forward.1} parent=1 // loop_footer
      %s28 = sadd.s32 1, %s24
    $region7: #{lc_forward.1} parent=1 // loop_footer_branch
      %23 = sbr.rel target = $region3
    $region8: #{lc_forward.1} parent=1 // loop_exit
      _
    %840 = vsyncpa [#allocation3], 1
    %s841 = scalar_lea.sflag [#allocation3], 1
    %842 = vsyncpa %s841, 1
    %843 = vsyncpa [#allocation6], 1
    %844 = vsyncpa [#allocation9], 1
    %845 = vsyncpa [#allocation4], 1
    %s846 = scalar_lea.sflag [#allocation4], 1
    %847 = vsyncpa %s846, 1

// kernel: lc_forward.1
$region0: #{lc_forward.1}
  #allocation0 [shape = 'u32[]', space=smem, size = 0x4, offset = 0x4, fixed_abs, tag = 'smem constant byte address 0x4 - core index']
  #allocation1 [shape = 'u32[144,128]{1,0:T(1,128)}', space=vmem, size = 0x12000, scoped, tag = 'internal scratch']
  %s0 = inlined_call_operand.hbm [shape: f32[16,256], index: 0, kind: input, shape index: {}]
  %s1 = inlined_call_operand.vmem [shape: f32[16,16], index: 1, kind: input, shape index: {}]
  %s2 = inlined_call_operand.vmem [shape: f32[16,4], index: 2, kind: input, shape index: {}]
  %s3 = inlined_call_operand.hbm [shape: f32[256,128], index: 3, kind: input, shape index: {}]
  %s4 = inlined_call_operand.hbm [shape: f32[128,128], index: 4, kind: input, shape index: {}]
  %s5 = inlined_call_operand.vmem [shape: f32[16,128], index: 5, kind: input, shape index: {}]
  %s6 = inlined_call_operand.hbm [shape: f32[4,128], index: 6, kind: input, shape index: {}]
  %s7 = inlined_call_operand.vmem [shape: f32[1,128], index: 7, kind: input, shape index: {}]
  %s8 = inlined_call_operand.hbm [shape: f32[16,128], index: 8, kind: output, shape index: {0}]
  %s9 = inlined_call_operand.vmem [shape: s32[16,1], index: 9, kind: output, shape index: {1}]
  %10 = xla_tuple %s8, %s9
  %s11 = sld [smem:[#allocation0]]
  $region89: #{lc_forward.1} parent=0
    _
  %s13 = ssub.s32 1, %s11
  %s14 = scalar_select 0, %s13, %s11
  $region1: #{lc_forward.1} parent=0
    #allocation2 [shape = 'u8[16384]{0}', space=vmem, size = 0x4000, scoped, tag = 'input window, operand 0']
    #allocation3 [shape = 's32[2]{0}', space=sflag, size = 0x8, scoped, tag = 'scoped memory for lc_forward.1']
    #allocation4 [shape = 's32[2]{0}', space=sflag, size = 0x8, scoped, tag = 'scoped memory for lc_forward.1']
    #allocation5 [shape = 'u8[131072]{0}', space=vmem, size = 0x20000, scoped, tag = 'input window, operand 3, single buffered']
    #allocation6 [shape = 's32[1]{0}', space=sflag, size = 0x4, scoped, tag = 'scoped memory for lc_forward.1']
    #allocation7 [shape = 'u8[65536]{0}', space=vmem, size = 0x10000, scoped, tag = 'input window, operand 4, single buffered']
    #allocation8 [shape = 'u8[2048]{0}', space=vmem, size = 0x800, scoped, tag = 'input window, operand 6, single buffered']
    #allocation9 [shape = 's32[1]{0}', space=sflag, size = 0x4, scoped, tag = 'scoped memory for lc_forward.1']
    #allocation10 [shape = 'u8[8192]{0}', space=vmem, size = 0x2000, scoped, tag = 'output window, operand 0']
    %15 = vsyncpa [#allocation3], 0
    %s16 = scalar_lea.sflag [#allocation3], 1
    %17 = vsyncpa %s16, 0
    %18 = vsyncpa [#allocation6], 0
    %19 = vsyncpa [#allocation9], 0
    %20 = vsyncpa [#allocation4], 0
    %s21 = scalar_lea.sflag [#allocation4], 1
    %22 = vsyncpa %s21, 0
    loop: start=0, step=1, limit=4
    $region2: #{lc_forward.1} parent=1 // loop_pre_header
      _
    $region3: #{lc_forward.1} parent=1 // loop_header
      %s24 = sphi 0, %s28
      %p25 = scmp.ge.s32.totalorder %s24, 4
      %s34 = sphi 0, %s36
      %s37 = sphi 0, %s34
      %s38 = sphi 0, %s37
      %s54 = sphi 0, %s38
      %s60 = sphi 0, %s62
      %s63 = sphi 0, %s60
      %s64 = sphi 0, %s63
      %s80 = sphi 0, %s64
      %s86 = sphi 0, %s88
      %s89 = sphi 0, %s86
      %s90 = sphi 0, %s89
      %s106 = sphi 0, %s90
      %s110 = sphi 0, %s110
      %s112 = sphi 0, %s110
      %s113 = sphi 0, %s112
      %s127 = sphi 0, %s113
      %s131 = sphi 0, %s131
      %s133 = sphi 0, %s131
      %s134 = sphi 0, %s133
      %s148 = sphi 0, %s134
      %s152 = sphi 0, %s152
      %s154 = sphi 0, %s152
      %s155 = sphi 0, %s154
      %s169 = sphi 0, %s155
      %s173 = sphi 0, %s173
      %s175 = sphi 0, %s173
      %s176 = sphi 0, %s175
      %s190 = sphi 0, %s176
      %s194 = sphi 0, %s194
      %s196 = sphi 0, %s194
      %s197 = sphi 0, %s196
      %s211 = sphi 0, %s197
      %s217 = sphi 0, %s219
      %s220 = sphi 0, %s217
      %s221 = sphi 0, %s220
      %s237 = sphi 0, %s221
      %s243 = sphi 0, %s245
      %s246 = sphi 0, %s243
      %s247 = sphi 0, %s246
      %s263 = sphi 0, %s247
    $region4: #{lc_forward.1} parent=1 // loop_header_branch
      %27 = sbr.rel (%p25) target = $region8
    $region5: #{lc_forward.1} parent=1 // loop_body
      %s29 = ssub.s32 %s24, 1
      %s30 = ssub.s32 %s24, 2
      %s31 = sadd.s32 %s24, 1
      %s32 = ssub.s32 %s24, %s31
      %p33 = scmp.eq.s32.totalorder %s32, 0
      %s35 = sadd.s32 %s34, 1
      %s36 = scalar_select %p33, %s34, %s35
      %p39 = pneg %p33
      %p40 = scmp.eq.s32.totalorder %s24, 1
      %p41 = por %p39, %p40
      %p42 = scmp.ne.s32.totalorder %s34, %s37
      %p43 = scmp.eq.s32.totalorder %s24, 0
      %p44 = por %p42, %p43
      %p45 = scmp.ne.s32.totalorder %s34, %s37
      %p46 = scmp.eq.s32.totalorder %s29, 1
      %p47 = por %p45, %p46
      %p48 = scmp.ne.s32.totalorder %s37, %s38
      %p49 = scmp.eq.s32.totalorder %s29, 0
      %p50 = por %p48, %p49
      %p51 = scmp.ne.s32.totalorder %s37, %s38
      %p52 = scmp.eq.s32.totalorder %s30, 1
      %p53 = por %p51, %p52
      %p55 = scmp.ne.s32.totalorder %s38, %s54
      %p56 = scmp.eq.s32.totalorder %s30, 0
      %p57 = por %p55, %p56
      %s58 = ssub.s32 %s24, %s31
      %p59 = scmp.eq.s32.totalorder %s58, 0
      %s61 = sadd.s32 %s60, 1
      %s62 = scalar_select %p59, %s60, %s61
      %p65 = pneg %p59
      %p66 = scmp.eq.s32.totalorder %s24, 1
      %p67 = por %p65, %p66
      %p68 = scmp.ne.s32.totalorder %s60, %s63
      %p69 = scmp.eq.s32.totalorder %s24, 0
      %p70 = por %p68, %p69
      %p71 = scmp.ne.s32.totalorder %s60, %s63
      %p72 = scmp.eq.s32.totalorder %s29, 1
      %p73 = por %p71, %p72
      %p74 = scmp.ne.s32.totalorder %s63, %s64
      %p75 = scmp.eq.s32.totalorder %s29, 0
      %p76 = por %p74, %p75
      %p77 = scmp.ne.s32.totalorder %s63, %s64
      %p78 = scmp.eq.s32.totalorder %s30, 1
      %p79 = por %p77, %p78
      %p81 = scmp.ne.s32.totalorder %s64, %s80
      %p82 = scmp.eq.s32.totalorder %s30, 0
      %p83 = por %p81, %p82
      %s84 = ssub.s32 %s24, %s31
      %p85 = scmp.eq.s32.totalorder %s84, 0
      %s87 = sadd.s32 %s86, 1
      %s88 = scalar_select %p85, %s86, %s87
      %p91 = pneg %p85
      %p92 = scmp.eq.s32.totalorder %s24, 1
      %p93 = por %p91, %p92
      %p94 = scmp.ne.s32.totalorder %s86, %s89
      %p95 = scmp.eq.s32.totalorder %s24, 0
      %p96 = por %p94, %p95
      %p97 = scmp.ne.s32.totalorder %s86, %s89
      %p98 = scmp.eq.s32.totalorder %s29, 1
      %p99 = por %p97, %p98
      %p100 = scmp.ne.s32.totalorder %s89, %s90
      %p101 = scmp.eq.s32.totalorder %s29, 0
      %p102 = por %p100, %p101
      %p103 = scmp.ne.s32.totalorder %s89, %s90
      %p104 = scmp.eq.s32.totalorder %s30, 1
      %p105 = por %p103, %p104
      %p107 = scmp.ne.s32.totalorder %s90, %s106
      %p108 = scmp.eq.s32.totalorder %s30, 0
      %p109 = por %p107, %p108
      %s111 = sadd.s32 %s110, 1
      %p114 = scmp.eq.s32.totalorder %s24, 1
      %p115 = scmp.ne.s32.totalorder %s110, %s112
      %p116 = scmp.eq.s32.totalorder %s24, 0
      %p117 = por %p115, %p116
      %p118 = scmp.ne.s32.totalorder %s110, %s112
      %p119 = scmp.eq.s32.totalorder %s29, 1
      %p120 = por %p118, %p119
      %p121 = scmp.ne.s32.totalorder %s112, %s113
      %p122 = scmp.eq.s32.totalorder %s29, 0
      %p123 = por %p121, %p122
      %p124 = scmp.ne.s32.totalorder %s112, %s113
      %p125 = scmp.eq.s32.totalorder %s30, 1
      %p126 = por %p124, %p125
      %p128 = scmp.ne.s32.totalorder %s113, %s127
      %p129 = scmp.eq.s32.totalorder %s30, 0
      %p130 = por %p128, %p129
      %s132 = sadd.s32 %s131, 1
      %p135 = scmp.eq.s32.totalorder %s24, 1
      %p136 = scmp.ne.s32.totalorder %s131, %s133
      %p137 = scmp.eq.s32.totalorder %s24, 0
      %p138 = por %p136, %p137
      %p139 = scmp.ne.s32.totalorder %s131, %s133
      %p140 = scmp.eq.s32.totalorder %s29, 1
      %p141 = por %p139, %p140
      %p142 = scmp.ne.s32.totalorder %s133, %s134
      %p143 = scmp.eq.s32.totalorder %s29, 0
      %p144 = por %p142, %p143
      %p145 = scmp.ne.s32.totalorder %s133, %s134
      %p146 = scmp.eq.s32.totalorder %s30, 1
      %p147 = por %p145, %p146
      %p149 = scmp.ne.s32.totalorder %s134, %s148
      %p150 = scmp.eq.s32.totalorder %s30, 0
      %p151 = por %p149, %p150
      %s153 = sadd.s32 %s152, 1
      %p156 = scmp.eq.s32.totalorder %s24, 1
      %p157 = scmp.ne.s32.totalorder %s152, %s154
      %p158 = scmp.eq.s32.totalorder %s24, 0
      %p159 = por %p157, %p158
      %p160 = scmp.ne.s32.totalorder %s152, %s154
      %p161 = scmp.eq.s32.totalorder %s29, 1
      %p162 = por %p160, %p161
      %p163 = scmp.ne.s32.totalorder %s154, %s155
      %p164 = scmp.eq.s32.totalorder %s29, 0
      %p165 = por %p163, %p164
      %p166 = scmp.ne.s32.totalorder %s154, %s155
      %p167 = scmp.eq.s32.totalorder %s30, 1
      %p168 = por %p166, %p167
      %p170 = scmp.ne.s32.totalorder %s155, %s169
      %p171 = scmp.eq.s32.totalorder %s30, 0
      %p172 = por %p170, %p171
      %s174 = sadd.s32 %s173, 1
      %p177 = scmp.eq.s32.totalorder %s24, 1
      %p178 = scmp.ne.s32.totalorder %s173, %s175
      %p179 = scmp.eq.s32.totalorder %s24, 0
      %p180 = por %p178, %p179
      %p181 = scmp.ne.s32.totalorder %s173, %s175
      %p182 = scmp.eq.s32.totalorder %s29, 1
      %p183 = por %p181, %p182
      %p184 = scmp.ne.s32.totalorder %s175, %s176
      %p185 = scmp.eq.s32.totalorder %s29, 0
      %p186 = por %p184, %p185
      %p187 = scmp.ne.s32.totalorder %s175, %s176
      %p188 = scmp.eq.s32.totalorder %s30, 1
      %p189 = por %p187, %p188
      %p191 = scmp.ne.s32.totalorder %s176, %s190
      %p192 = scmp.eq.s32.totalorder %s30, 0
      %p193 = por %p191, %p192
      %s195 = sadd.s32 %s194, 1
      %p198 = scmp.eq.s32.totalorder %s24, 1
      %p199 = scmp.ne.s32.totalorder %s194, %s196
      %p200 = scmp.eq.s32.totalorder %s24, 0
      %p201 = por %p199, %p200
      %p202 = scmp.ne.s32.totalorder %s194, %s196
      %p203 = scmp.eq.s32.totalorder %s29, 1
      %p204 = por %p202, %p203
      %p205 = scmp.ne.s32.totalorder %s196, %s197
      %p206 = scmp.eq.s32.totalorder %s29, 0
      %p207 = por %p205, %p206
      %p208 = scmp.ne.s32.totalorder %s196, %s197
      %p209 = scmp.eq.s32.totalorder %s30, 1
      %p210 = por %p208, %p209
      %p212 = scmp.ne.s32.totalorder %s197, %s211
      %p213 = scmp.eq.s32.totalorder %s30, 0
      %p214 = por %p212, %p213
      %s215 = ssub.s32 %s24, %s31
      %p216 = scmp.eq.s32.totalorder %s215, 0
      %s218 = sadd.s32 %s217, 1
      %s219 = scalar_select %p216, %s217, %s218
      %p222 = pneg %p216
      %p223 = scmp.eq.s32.totalorder %s24, 1
      %p224 = por %p222, %p223
      %p225 = scmp.ne.s32.totalorder %s217, %s220
      %p226 = scmp.eq.s32.totalorder %s24, 0
      %p227 = por %p225, %p226
      %p228 = scmp.ne.s32.totalorder %s217, %s220
      %p229 = scmp.eq.s32.totalorder %s29, 1
      %p230 = por %p228, %p229
      %p231 = scmp.ne.s32.totalorder %s220, %s221
      %p232 = scmp.eq.s32.totalorder %s29, 0
      %p233 = por %p231, %p232
      %p234 = scmp.ne.s32.totalorder %s220, %s221
      %p235 = scmp.eq.s32.totalorder %s30, 1
      %p236 = por %p234, %p235
      %p238 = scmp.ne.s32.totalorder %s221, %s237
      %p239 = scmp.eq.s32.totalorder %s30, 0
      %p240 = por %p238, %p239
      %s241 = ssub.s32 %s24, %s31
      %p242 = scmp.eq.s32.totalorder %s241, 0
      %s244 = sadd.s32 %s243, 1
      %s245 = scalar_select %p242, %s243, %s244
      %p248 = pneg %p242
      %p249 = scmp.eq.s32.totalorder %s24, 1
      %p250 = por %p248, %p249
      %p251 = scmp.ne.s32.totalorder %s243, %s246
      %p252 = scmp.eq.s32.totalorder %s24, 0
      %p253 = por %p251, %p252
      %p254 = scmp.ne.s32.totalorder %s243, %s246
      %p255 = scmp.eq.s32.totalorder %s29, 1
      %p256 = por %p254, %p255
      %p257 = scmp.ne.s32.totalorder %s246, %s247
      %p258 = scmp.eq.s32.totalorder %s29, 0
      %p259 = por %p257, %p258
      %p260 = scmp.ne.s32.totalorder %s246, %s247
      %p261 = scmp.eq.s32.totalorder %s30, 1
      %p262 = por %p260, %p261
      %p264 = scmp.ne.s32.totalorder %s247, %s263
      %p265 = scmp.eq.s32.totalorder %s30, 0
      %p266 = por %p264, %p265
      %p267 = scmp.le.s32.totalorder 1, %s24
      %p268 = scmp.lt.s32.totalorder %s24, 3
      %p269 = pnand %p267, %p268
      %p270 = pneg %p269
      // Predicated region
      $region9: #{lc_forward.1} parent=5 // pred_check
        _
      $region10: #{lc_forward.1} parent=5 // pred_check_branch
        %272 = sbr.rel (%p269) target = $region12
      $region11: #{lc_forward.1} parent=5 // pred_region
        %s273 = ssub.s32 %s24, 1
        // Predicated region
        $region13: #{lc_forward.1} parent=11 // pred_check
          %p274 = pneg %p123
        $region14: #{lc_forward.1} parent=11 // pred_check_branch
          %276 = sbr.rel (%p274) target = $region16
        $region15: #{lc_forward.1} parent=11 // pred_region
          %s278 = ssub.s32 4096, 4096
          %279 = vsyncadd [#allocation6], %s278
          %s280 = sshll.u32 [#allocation5], 4
          %s281 = int_to_ptr.vmem [resolvable:$true] %s280
          %286 = dma.hbm_to_vmem [thread:$0]  %s3, 4096, %s281, [#allocation6], 128, 128, 8
        $region16: #{lc_forward.1} parent=11 // pred_fallthru
          _
        // Predicated region
        $region17: #{lc_forward.1} parent=11 // pred_check
          %p287 = pneg %p144
        $region18: #{lc_forward.1} parent=11 // pred_check_branch
          %289 = sbr.rel (%p287) target = $region20
        $region19: #{lc_forward.1} parent=11 // pred_region
          %s291 = ssub.s32 2048, 2048
          %292 = vsyncadd [#allocation6], %s291
          %s293 = sshll.u32 [#allocation7], 4
          %s294 = int_to_ptr.vmem [resolvable:$true] %s293
          %299 = dma.hbm_to_vmem [thread:$0]  %s4, 2048, %s294, [#allocation6], 128, 128, 8
        $region20: #{lc_forward.1} parent=11 // pred_fallthru
          _
        // Predicated region
        $region21: #{lc_forward.1} parent=11 // pred_check
          %p300 = pneg %p165
        $region22: #{lc_forward.1} parent=11 // pred_check_branch
          %302 = sbr.rel (%p300) target = $region24
        $region23: #{lc_forward.1} parent=11 // pred_region
          _
        $region24: #{lc_forward.1} parent=11 // pred_fallthru
          _
        // Predicated region
        $region25: #{lc_forward.1} parent=11 // pred_check
          %p303 = pneg %p186
        $region26: #{lc_forward.1} parent=11 // pred_check_branch
          %305 = sbr.rel (%p303) target = $region28
        $region27: #{lc_forward.1} parent=11 // pred_region
          %s307 = ssub.s32 64, 64
          %308 = vsyncadd [#allocation9], %s307
          %s310 = sshll.u32 [#allocation8], 4
          %s311 = int_to_ptr.vmem [resolvable:$true] %s310
          %313 = dma.hbm_to_vmem [thread:$0]  %s6, 64, %s311, [#allocation9]
        $region28: #{lc_forward.1} parent=11 // pred_fallthru
          _
        // Predicated region
        $region29: #{lc_forward.1} parent=11 // pred_check
          %p314 = pneg %p207
        $region30: #{lc_forward.1} parent=11 // pred_check_branch
          %316 = sbr.rel (%p314) target = $region32
        $region31: #{lc_forward.1} parent=11 // pred_region
          _
        $region32: #{lc_forward.1} parent=11 // pred_fallthru
          _
      $region12: #{lc_forward.1} parent=5 // pred_fallthru
        _
      %p317 = scmp.lt.s32.totalorder %s24, 2
      // Predicated region
      $region33: #{lc_forward.1} parent=5 // pred_check
        %p318 = pneg %p317
      $region34: #{lc_forward.1} parent=5 // pred_check_branch
        %320 = sbr.rel (%p318) target = $region36
      $region35: #{lc_forward.1} parent=5 // pred_region
        // Predicated region
        $region37: #{lc_forward.1} parent=35 // pred_check
          %p321 = pneg %p44
        $region38: #{lc_forward.1} parent=35 // pred_check_branch
          %323 = sbr.rel (%p321) target = $region40
        $region39: #{lc_forward.1} parent=35 // pred_region
          %s324 = sand.u32 %s34, 1
          %s325 = scalar_lea.sflag [#allocation3], %s324
          %s326 = sand.u32 %s34, 1
          %s327 = smul.addr %s326, 16
          %s328 = scalar_lea.vmem [#allocation2], %s327
          %s330 = ssub.s32 256, 256
          %331 = vsyncadd %s325, %s330
          %s332 = smul.addr %s24, 2
          %s333 = smul.addr %s332, 128
          %s334 = scalar_lea.hbm %s0, %s333
          %s336 = sshll.u32 %s328, 4
          %s337 = int_to_ptr.vmem [resolvable:$true] %s336
          %339 = dma.hbm_to_vmem [thread:$0]  %s334, 256, %s337, %s325
        $region40: #{lc_forward.1} parent=35 // pred_fallthru
          _
        // Predicated region
        $region41: #{lc_forward.1} parent=35 // pred_check
          %p340 = pneg %p70
        $region42: #{lc_forward.1} parent=35 // pred_check_branch
          %342 = sbr.rel (%p340) target = $region44
        $region43: #{lc_forward.1} parent=35 // pred_region
          %p343 = scmp.lt.s32.totalorder %s24, 1
          %s344 = scalar_select %p343, %s24, 1
          %s345 = smul.addr %s344, 8
          %s346 = scalar_lea.vmem %s1, %s345
        $region44: #{lc_forward.1} parent=35 // pred_fallthru
          _
        // Predicated region
        $region45: #{lc_forward.1} parent=35 // pred_check
          %p347 = pneg %p96
        $region46: #{lc_forward.1} parent=35 // pred_check_branch
          %349 = sbr.rel (%p347) target = $region48
        $region47: #{lc_forward.1} parent=35 // pred_region
          %p350 = scmp.lt.s32.totalorder %s24, 1
          %s351 = scalar_select %p350, %s24, 1
          %s352 = smul.addr %s351, 8
          %s353 = scalar_lea.vmem %s2, %s352
        $region48: #{lc_forward.1} parent=35 // pred_fallthru
          _
      $region36: #{lc_forward.1} parent=5 // pred_fallthru
        _
      %p354 = scmp.le.s32.totalorder 1, %s24
      %p355 = scmp.lt.s32.totalorder %s24, 3
      %p356 = pnand %p354, %p355
      %p357 = pneg %p356
      // Predicated region
      $region49: #{lc_forward.1} parent=5 // pred_check
        _
      $region50: #{lc_forward.1} parent=5 // pred_check_branch
        %359 = sbr.rel (%p356) target = $region52
      $region51: #{lc_forward.1} parent=5 // pred_region
        %s360 = ssub.s32 %s24, 1
        %s361 = sand.u32 %s37, 1
        %s362 = scalar_lea.sflag [#allocation3], %s361
        %s363 = sand.u32 %s37, 1
        %s364 = smul.addr %s363, 16
        %s365 = scalar_lea.vmem [#allocation2], %s364
        // Predicated region
        $region53: #{lc_forward.1} parent=51 // pred_check
          %p366 = pneg %p50
        $region54: #{lc_forward.1} parent=51 // pred_check_branch
          %368 = sbr.rel (%p366) target = $region56
        $region55: #{lc_forward.1} parent=51 // pred_region
          %369 = dma.done %s362, 256
        $region56: #{lc_forward.1} parent=51 // pred_fallthru
          _
        // Predicated region
        $region57: #{lc_forward.1} parent=51 // pred_check
          %p370 = pneg %p123
        $region58: #{lc_forward.1} parent=51 // pred_check_branch
          %372 = sbr.rel (%p370) target = $region60
        $region59: #{lc_forward.1} parent=51 // pred_region
          %373 = dma.done [#allocation6], 4096
        $region60: #{lc_forward.1} parent=51 // pred_fallthru
          _
        // Predicated region
        $region61: #{lc_forward.1} parent=51 // pred_check
          %p374 = pneg %p144
        $region62: #{lc_forward.1} parent=51 // pred_check_branch
          %376 = sbr.rel (%p374) target = $region64
        $region63: #{lc_forward.1} parent=51 // pred_region
          %377 = dma.done [#allocation6], 2048
        $region64: #{lc_forward.1} parent=51 // pred_fallthru
          _
        // Predicated region
        $region65: #{lc_forward.1} parent=51 // pred_check
          %p378 = pneg %p186
        $region66: #{lc_forward.1} parent=51 // pred_check_branch
          %380 = sbr.rel (%p378) target = $region68
        $region67: #{lc_forward.1} parent=51 // pred_region
          %381 = dma.done [#allocation9], 64
        $region68: #{lc_forward.1} parent=51 // pred_fallthru
          _
        %s382 = sand.u32 %s37, 1
        %s383 = scalar_lea.sflag [#allocation3], %s382
        %s384 = sand.u32 %s37, 1
        %s385 = smul.addr %s384, 16
        %s386 = scalar_lea.vmem [#allocation2], %s385
        %p387 = pneg %p50
        %p388 = pneg %p47
        %p389 = scmp.lt.s32.totalorder %s29, 1
        %s390 = scalar_select %p389, %s29, 1
        %s391 = smul.addr %s390, 8
        %s392 = scalar_lea.vmem %s1, %s391
        %p393 = pneg %p76
        %p394 = pneg %p73
        %p395 = scmp.lt.s32.totalorder %s29, 1
        %s396 = scalar_select %p395, %s29, 1
        %s397 = smul.addr %s396, 8
        %s398 = scalar_lea.vmem %s2, %s397
        %p399 = pneg %p102
        %p400 = pneg %p99
        %p401 = pneg %p123
        %p402 = pneg %p120
        %p403 = pneg %p144
        %p404 = pneg %p141
        %p405 = pneg %p165
        %p406 = pneg %p162
        %p407 = pneg %p186
        %p408 = pneg %p183
        %p409 = pneg %p207
        %p410 = pneg %p204
        %p411 = pneg %p233
        %p412 = pneg %p230
        %s413 = sand.u32 %s220, 1
        %s414 = scalar_lea.sflag [#allocation4], %s413
        %s415 = sand.u32 %s220, 1
        %s416 = smul.addr %s415, 8
        %s417 = scalar_lea.vmem [#allocation10], %s416
        %p418 = pneg %p259
        %p419 = pneg %p256
        %p420 = scmp.lt.s32.totalorder %s29, 1
        %s421 = scalar_select %p420, %s29, 1
        %s422 = smul.addr %s421, 8
        %s423 = scalar_lea.vmem %s9, %s422
        %p424 = scmp.lt.s32.totalorder %s29, 1
        %s425 = scalar_select %p424, %s29, 1
        %s426 = smul.addr %s425, 8
        %s427 = scalar_lea.vmem %s1, %s426
        %p428 = scmp.lt.s32.totalorder %s29, 1
        %s429 = scalar_select %p428, %s29, 1
        %s430 = smul.addr %s429, 8
        %s431 = scalar_lea.vmem %s2, %s430
        %p432 = scmp.lt.s32.totalorder %s29, 1
        %s433 = scalar_select %p432, %s29, 1
        %s434 = smul.addr %s433, 8
        %s435 = scalar_lea.vmem %s9, %s434
        %v436 = vld [vmem:[%s431] sm:$0xff]
        %v437 = vld [vmem:[#allocation8] sm:$0xf]
        %v438 = vld [vmem:[%s7] sm:$0x1]
        %440 = vset.pattern.permute.xlu0 0
        %441 = vperm.xlu0 %440, %v436
        %v442 = vpop.permute.xlu0 %441
        %v444 = vlaneseq
        %v445 = vshrl.u32 %v444, 7
        %v446 = vsub.s32 0, %v445
        %v447 = vrot.slane %v437, %v446
        %v448 = vmul.f32 %v442, %v447
        %v450 = vlaneseq
        %v451 = vshrl.u32 %v450, 7
        %v452 = vsub.s32 0, %v451
        %v453 = vrot.slane %v438, %v452
        %v455 = vadd.f32 %v453, %v448
        %456 = vset.pattern.permute.xlu0 1
        %457 = vperm.xlu0 %456, %v436
        %v458 = vpop.permute.xlu0 %457
        %v460 = vlaneseq
        %v461 = vshrl.u32 %v460, 7
        %v462 = vsub.s32 1, %v461
        %v463 = vrot.slane %v437, %v462
        %v464 = vmul.f32 %v458, %v463
        %v465 = vadd.f32 %v455, %v464
        %466 = vset.pattern.permute.xlu0 2
        %467 = vperm.xlu0 %466, %v436
        %v468 = vpop.permute.xlu0 %467
        %v470 = vlaneseq
        %v471 = vshrl.u32 %v470, 7
        %v472 = vsub.s32 2, %v471
        %v473 = vrot.slane %v437, %v472
        %v474 = vmul.f32 %v468, %v473
        %v475 = vadd.f32 %v465, %v474
        %476 = vset.pattern.permute.xlu0 3
        %477 = vperm.xlu0 %476, %v436
        %v478 = vpop.permute.xlu0 %477
        %v480 = vlaneseq
        %v481 = vshrl.u32 %v480, 7
        %v482 = vsub.s32 3, %v481
        %v483 = vrot.slane %v437, %v482
        %v484 = vmul.f32 %v478, %v483
        %v485 = vadd.f32 %v475, %v484
        %v486 = vmax.f32 %v485, 0.0
        %v487 = vld [vmem:[%s427] sm:$0xff]
        %vm488 = vcmask 130048
        %v489 = vsel %vm488, %v487, -inf
        %490 = vmax.xlane.f32.xlu0 %v489
        %v491 = vpop.xlane.xlu0 %490
        %v492 = vsub.f32 %v487, %v491
        %v493 = vmul.f32 %v492, 1.442695
        %v494 = vpow.pop %v493
        %v495 = vsel %vm488, %v494, 0.0
        %496 = vadd.xlane.f32.xlu0 %v495
        %v497 = vpop.xlane.xlu0 %496
        %v498 = vrcp.pop %v497
        %v499 = vmul.f32 %v494, %v498
        %v500 = vld [vmem:[%s365] sm:$0xff]
        %v501 = vld [vmem:[%s365 + $0x8] sm:$0xff]
        %v502 = vld [vmem:[#allocation5] sm:$0xff]
        %v503 = vld [vmem:[#allocation5 + $0x8] sm:$0xff]
        %v504 = vld [vmem:[#allocation5 + $0x10] sm:$0xff]
        %v505 = vld [vmem:[#allocation5 + $0x18] sm:$0xff]
        %v506 = vld [vmem:[#allocation5 + $0x20] sm:$0xff]
        %v507 = vld [vmem:[#allocation5 + $0x28] sm:$0xff]
        %v508 = vld [vmem:[#allocation5 + $0x30] sm:$0xff]
        %v509 = vld [vmem:[#allocation5 + $0x38] sm:$0xff]
        %v510 = vld [vmem:[#allocation5 + $0x40] sm:$0xff]
        %v511 = vld [vmem:[#allocation5 + $0x48] sm:$0xff]
        %v512 = vld [vmem:[#allocation5 + $0x50] sm:$0xff]
        %v513 = vld [vmem:[#allocation5 + $0x58] sm:$0xff]
        %v514 = vld [vmem:[#allocation5 + $0x60] sm:$0xff]
        %v515 = vld [vmem:[#allocation5 + $0x68] sm:$0xff]
        %v516 = vld [vmem:[#allocation5 + $0x70] sm:$0xff]
        %v517 = vld [vmem:[#allocation5 + $0x78] sm:$0xff]
        %v518 = vld [vmem:[#allocation5 + $0x80] sm:$0xff]
        %v519 = vld [vmem:[#allocation5 + $0x88] sm:$0xff]
        %v520 = vld [vmem:[#allocation5 + $0x90] sm:$0xff]
        %v521 = vld [vmem:[#allocation5 + $0x98] sm:$0xff]
        %v522 = vld [vmem:[#allocation5 + $0xa0] sm:$0xff]
        %v523 = vld [vmem:[#allocation5 + $0xa8] sm:$0xff]
        %v524 = vld [vmem:[#allocation5 + $0xb0] sm:$0xff]
        %v525 = vld [vmem:[#allocation5 + $0xb8] sm:$0xff]
        %v526 = vld [vmem:[#allocation5 + $0xc0] sm:$0xff]
        %v527 = vld [vmem:[#allocation5 + $0xc8] sm:$0xff]
        %v528 = vld [vmem:[#allocation5 + $0xd0] sm:$0xff]
        %v529 = vld [vmem:[#allocation5 + $0xd8] sm:$0xff]
        %v530 = vld [vmem:[#allocation5 + $0xe0] sm:$0xff]
        %v531 = vld [vmem:[#allocation5 + $0xe8] sm:$0xff]
        %v532 = vld [vmem:[#allocation5 + $0xf0] sm:$0xff]
        %v533 = vld [vmem:[#allocation5 + $0xf8] sm:$0xff]
        %v534 = vld [vmem:[#allocation7] sm:$0xff]
        %v535 = vld [vmem:[#allocation7 + $0x8] sm:$0xff]
        %v536 = vld [vmem:[#allocation7 + $0x10] sm:$0xff]
        %v537 = vld [vmem:[#allocation7 + $0x18] sm:$0xff]
        %v538 = vld [vmem:[#allocation7 + $0x20] sm:$0xff]
        %v539 = vld [vmem:[#allocation7 + $0x28] sm:$0xff]
        %v540 = vld [vmem:[#allocation7 + $0x30] sm:$0xff]
        %v541 = vld [vmem:[#allocation7 + $0x38] sm:$0xff]
        %v542 = vld [vmem:[#allocation7 + $0x40] sm:$0xff]
        %v543 = vld [vmem:[#allocation7 + $0x48] sm:$0xff]
        %v544 = vld [vmem:[#allocation7 + $0x50] sm:$0xff]
        %v545 = vld [vmem:[#allocation7 + $0x58] sm:$0xff]
        %v546 = vld [vmem:[#allocation7 + $0x60] sm:$0xff]
        %v547 = vld [vmem:[#allocation7 + $0x68] sm:$0xff]
        %v548 = vld [vmem:[#allocation7 + $0x70] sm:$0xff]
        %v549 = vld [vmem:[#allocation7 + $0x78] sm:$0xff]
        %550 = vmatprep.subr.mxu0 0.0
        %551 = vmatpush1.msra.mxu0 %v534
        %552 = vmatprep.subr.mxu0 0.0
        %553 = vmatpush1.msra.mxu0 %v535
        %554 = vmatprep.subr.mxu0 0.0
        %555 = vmatpush1.msra.mxu0 %v536
        %556 = vmatprep.subr.mxu0 0.0
        %557 = vmatpush1.msra.mxu0 %v537
        %558 = vmatprep.subr.mxu0 0.0
        %559 = vmatpush1.msra.mxu0 %v538
        %560 = vmatprep.subr.mxu0 0.0
        %561 = vmatpush1.msra.mxu0 %v539
        %562 = vmatprep.subr.mxu0 0.0
        %563 = vmatpush1.msra.mxu0 %v540
        %564 = vmatprep.subr.mxu0 0.0
        %565 = vmatpush1.msra.mxu0 %v541
        %566 = vmatprep.subr.mxu0 0.0
        %567 = vmatpush1.msra.mxu0 %v542
        %568 = vmatprep.subr.mxu0 0.0
        %569 = vmatpush1.msra.mxu0 %v543
        %570 = vmatprep.subr.mxu0 0.0
        %571 = vmatpush1.msra.mxu0 %v544
        %572 = vmatprep.subr.mxu0 0.0
        %573 = vmatpush1.msra.mxu0 %v545
        %574 = vmatprep.subr.mxu0 0.0
        %575 = vmatpush1.msra.mxu0 %v546
        %576 = vmatprep.subr.mxu0 0.0
        %577 = vmatpush1.msra.mxu0 %v547
        %578 = vmatprep.subr.mxu0 0.0
        %579 = vmatpush1.msra.mxu0 %v548
        %580 = vmatprep.subr.mxu0 0.0
        %581 = vmatpush1.msra.mxu0 %v549
        %582 = vmatprep.subr.mxu0 0.0
        %583 = vmatpush1.msra.mxu0 0.0
        %584 = vmatprep.subr.mxu0 0.0
        %585 = vmatpush1.msra.mxu0 0.0
        %586 = vmatprep.subr.mxu0 0.0
        %587 = vmatpush1.msra.mxu0 0.0
        %588 = vmatprep.subr.mxu0 0.0
        %589 = vmatpush1.msra.mxu0 0.0
        %590 = vmatprep.subr.mxu0 0.0
        %591 = vmatpush1.msra.mxu0 0.0
        %592 = vmatprep.subr.mxu0 0.0
        %593 = vmatpush1.msra.mxu0 0.0
        %594 = vmatprep.subr.mxu0 0.0
        %595 = vmatpush1.msra.mxu0 0.0
        %596 = vmatprep.subr.mxu0 0.0
        %597 = vmatpush1.msra.mxu0 0.0
        %598 = vmatprep.subr.mxu0 0.0
        %599 = vmatpush1.msra.mxu0 0.0
        %600 = vmatprep.subr.mxu0 0.0
        %601 = vmatpush1.msra.mxu0 0.0
        %602 = vmatprep.subr.mxu0 0.0
        %603 = vmatpush1.msra.mxu0 0.0
        %604 = vmatprep.subr.mxu0 0.0
        %605 = vmatpush1.msra.mxu0 0.0
        %606 = vmatprep.subr.mxu0 0.0
        %607 = vmatpush1.msra.mxu0 0.0
        %608 = vmatprep.subr.mxu0 0.0
        %609 = vmatpush1.msra.mxu0 0.0
        %610 = vmatprep.subr.mxu0 0.0
        %611 = vmatpush1.msra.mxu0 0.0
        %612 = vmatprep.subr.mxu0 0.0
        %613 = vmatpush1.msra.mxu0 0.0
        %614 = vmatprep.mubr.f32.mxu0 0.0
        %615 = vmatmul.mubr.f32.gmra.mrb[0].mxu0 %v486
        %v616 = vpop.f32.mrb[0].mxu0
        %v617 = vadd.f32 0.0, %v616
        %v618 = vpop.f32.mrb[0].mxu0
        %619 = vdwg.mxu0
        %620 = vmatprep.subr.mxu0 0.0
        %621 = vmatpush1.msra.mxu0 %v502
        %622 = vmatprep.subr.mxu0 0.0
        %623 = vmatpush1.msra.mxu0 %v503
        %624 = vmatprep.subr.mxu0 0.0
        %625 = vmatpush1.msra.mxu0 %v504
        %626 = vmatprep.subr.mxu0 0.0
        %627 = vmatpush1.msra.mxu0 %v505
        %628 = vmatprep.subr.mxu0 0.0
        %629 = vmatpush1.msra.mxu0 %v506
        %630 = vmatprep.subr.mxu0 0.0
        %631 = vmatpush1.msra.mxu0 %v507
        %632 = vmatprep.subr.mxu0 0.0
        %633 = vmatpush1.msra.mxu0 %v508
        %634 = vmatprep.subr.mxu0 0.0
        %635 = vmatpush1.msra.mxu0 %v509
        %636 = vmatprep.subr.mxu0 0.0
        %637 = vmatpush1.msra.mxu0 %v510
        %638 = vmatprep.subr.mxu0 0.0
        %639 = vmatpush1.msra.mxu0 %v511
        %640 = vmatprep.subr.mxu0 0.0
        %641 = vmatpush1.msra.mxu0 %v512
        %642 = vmatprep.subr.mxu0 0.0
        %643 = vmatpush1.msra.mxu0 %v513
        %644 = vmatprep.subr.mxu0 0.0
        %645 = vmatpush1.msra.mxu0 %v514
        %646 = vmatprep.subr.mxu0 0.0
        %647 = vmatpush1.msra.mxu0 %v515
        %648 = vmatprep.subr.mxu0 0.0
        %649 = vmatpush1.msra.mxu0 %v516
        %650 = vmatprep.subr.mxu0 0.0
        %651 = vmatpush1.msra.mxu0 %v517
        %652 = vmatprep.subr.mxu0 0.0
        %653 = vmatpush1.msra.mxu0 %v518
        %654 = vmatprep.subr.mxu0 0.0
        %655 = vmatpush1.msra.mxu0 %v519
        %656 = vmatprep.subr.mxu0 0.0
        %657 = vmatpush1.msra.mxu0 %v520
        %658 = vmatprep.subr.mxu0 0.0
        %659 = vmatpush1.msra.mxu0 %v521
        %660 = vmatprep.subr.mxu0 0.0
        %661 = vmatpush1.msra.mxu0 %v522
        %662 = vmatprep.subr.mxu0 0.0
        %663 = vmatpush1.msra.mxu0 %v523
        %664 = vmatprep.subr.mxu0 0.0
        %665 = vmatpush1.msra.mxu0 %v524
        %666 = vmatprep.subr.mxu0 0.0
        %667 = vmatpush1.msra.mxu0 %v525
        %668 = vmatprep.subr.mxu0 0.0
        %669 = vmatpush1.msra.mxu0 %v526
        %670 = vmatprep.subr.mxu0 0.0
        %671 = vmatpush1.msra.mxu0 %v527
        %672 = vmatprep.subr.mxu0 0.0
        %673 = vmatpush1.msra.mxu0 %v528
        %674 = vmatprep.subr.mxu0 0.0
        %675 = vmatpush1.msra.mxu0 %v529
        %676 = vmatprep.subr.mxu0 0.0
        %677 = vmatpush1.msra.mxu0 %v530
        %678 = vmatprep.subr.mxu0 0.0
        %679 = vmatpush1.msra.mxu0 %v531
        %680 = vmatprep.subr.mxu0 0.0
        %681 = vmatpush1.msra.mxu0 %v532
        %682 = vmatprep.subr.mxu0 0.0
        %683 = vmatpush1.msra.mxu0 %v533
        %684 = vmatprep.mubr.f32.mxu0 %v501
        %685 = vmatmul.mubr.f32.gmra.mrb[0].mxu0 %v500
        %v686 = vpop.f32.mrb[0].mxu0
        %v687 = vadd.f32 %v617, %v686
        %v688 = vpop.f32.mrb[0].mxu0
        %689 = vdwg.mxu0
        %v690 = vld [vmem:[%s5] sm:$0xff]
        %v691 = vld [vmem:[%s5 + $0x8] sm:$0xff]
        %v693 = vsel %vm488, %v499, 0
        %695 = vmatprep.subr.mxu0 0.0
        %696 = vmatpush1.msra.mxu0 %v690
        %697 = vmatprep.subr.mxu0 0.0
        %698 = vmatpush1.msra.mxu0 %v691
        %699 = vmatprep.subr.mxu0 0.0
        %700 = vmatpush1.msra.mxu0 0.0
        %701 = vmatprep.subr.mxu0 0.0
        %702 = vmatpush1.msra.mxu0 0.0
        %703 = vmatprep.subr.mxu0 0.0
        %704 = vmatpush1.msra.mxu0 0.0
        %705 = vmatprep.subr.mxu0 0.0
        %706 = vmatpush1.msra.mxu0 0.0
        %707 = vmatprep.subr.mxu0 0.0
        %708 = vmatpush1.msra.mxu0 0.0
        %709 = vmatprep.subr.mxu0 0.0
        %710 = vmatpush1.msra.mxu0 0.0
        %711 = vmatprep.subr.mxu0 0.0
        %712 = vmatpush1.msra.mxu0 0.0
        %713 = vmatprep.subr.mxu0 0.0
        %714 = vmatpush1.msra.mxu0 0.0
        %715 = vmatprep.subr.mxu0 0.0
        %716 = vmatpush1.msra.mxu0 0.0
        %717 = vmatprep.subr.mxu0 0.0
        %718 = vmatpush1.msra.mxu0 0.0
        %719 = vmatprep.subr.mxu0 0.0
        %720 = vmatpush1.msra.mxu0 0.0
        %721 = vmatprep.subr.mxu0 0.0
        %722 = vmatpush1.msra.mxu0 0.0
        %723 = vmatprep.subr.mxu0 0.0
        %724 = vmatpush1.msra.mxu0 0.0
        %725 = vmatprep.subr.mxu0 0.0
        %726 = vmatpush1.msra.mxu0 0.0
        %727 = vmatprep.subr.mxu0 0.0
        %728 = vmatpush1.msra.mxu0 0.0
        %729 = vmatprep.subr.mxu0 0.0
        %730 = vmatpush1.msra.mxu0 0.0
        %731 = vmatprep.subr.mxu0 0.0
        %732 = vmatpush1.msra.mxu0 0.0
        %733 = vmatprep.subr.mxu0 0.0
        %734 = vmatpush1.msra.mxu0 0.0
        %735 = vmatprep.subr.mxu0 0.0
        %736 = vmatpush1.msra.mxu0 0.0
        %737 = vmatprep.subr.mxu0 0.0
        %738 = vmatpush1.msra.mxu0 0.0
        %739 = vmatprep.subr.mxu0 0.0
        %740 = vmatpush1.msra.mxu0 0.0
        %741 = vmatprep.subr.mxu0 0.0
        %742 = vmatpush1.msra.mxu0 0.0
        %743 = vmatprep.subr.mxu0 0.0
        %744 = vmatpush1.msra.mxu0 0.0
        %745 = vmatprep.subr.mxu0 0.0
        %746 = vmatpush1.msra.mxu0 0.0
        %747 = vmatprep.subr.mxu0 0.0
        %748 = vmatpush1.msra.mxu0 0.0
        %749 = vmatprep.subr.mxu0 0.0
        %750 = vmatpush1.msra.mxu0 0.0
        %751 = vmatprep.subr.mxu0 0.0
        %752 = vmatpush1.msra.mxu0 0.0
        %753 = vmatprep.subr.mxu0 0.0
        %754 = vmatpush1.msra.mxu0 0.0
        %755 = vmatprep.subr.mxu0 0.0
        %756 = vmatpush1.msra.mxu0 0.0
        %757 = vmatprep.subr.mxu0 0.0
        %758 = vmatpush1.msra.mxu0 0.0
        %759 = vmatprep.mubr.f32.mxu0 0.0
        %760 = vmatmul.mubr.f32.gmra.mrb[0].mxu0 %v693
        %v761 = vpop.f32.mrb[0].mxu0
        %v762 = vadd.f32 0.0, %v761
        %v763 = vpop.f32.mrb[0].mxu0
        %764 = vdwg.mxu0
        %v765 = vadd.f32 %v687, %v762
        %766 = vst [vmem:[%s417] sm:$0xff] %v765
        %v767 = vlaneseq
        %v768 = vand.u32 %v767, 127
        %vm769 = vcmp.ge.s32.totalorder %v768, 1
        %vm770 = vcmp.lt.s32.totalorder %v768, 16
        %vm771 = vmand %vm769, %vm770
        %v772 = vsel %vm771, %v765, -inf
        %773 = vmax.xlane.f32.xlu0 %v772
        %v774 = vpop.xlane.xlu0 %773
        %vm775 = vcmp.eq.f32.partialorder %v772, %v774
        %vm776 = vmand %vm775, %vm771
        %v777 = vsel %vm776, %v768, 128
        %v778 = vand.u32 %v777, 65535
        %v779 = vshra.s32 %v777, 16
        %v780 = vcvt.s32.f32 %v778
        %v781 = vcvt.s32.f32 %v779
        %782 = vmin.xlane.f32.xlu0 %v781
        %v783 = vpop.xlane.xlu0 %782
        %vm784 = vcmp.eq.f32.partialorder %v781, %v783
        %v785 = vsel %vm784, %v780, inf
        %786 = vmin.xlane.f32.xlu0 %v785
        %v787 = vpop.xlane.xlu0 %786
        %v788 = vcvt.f32.s32 %v787
        %v789 = vcvt.f32.s32 %v783
        %v790 = vshll.u32 %v789, 16
        %v791 = vadd.s32 %v790, %v788
        %vm792 = vcmask 7168
        %793 = vst.msk [vmem:[%s435] sm:$0xff] %vm792, %v791
        %s794 = sand.u32 %s220, 1
        %s795 = scalar_lea.sflag [#allocation4], %s794
        %s796 = sand.u32 %s220, 1
        %s797 = smul.addr %s796, 8
        %s798 = scalar_lea.vmem [#allocation10], %s797
        %p799 = scmp.lt.s32.totalorder %s29, 1
        %s800 = scalar_select %p799, %s29, 1
        %s801 = smul.addr %s800, 8
        %s802 = scalar_lea.vmem %s9, %s801
        // Predicated region
        $region69: #{lc_forward.1} parent=51 // pred_check
          %p803 = pneg %p230
        $region70: #{lc_forward.1} parent=51 // pred_check_branch
          %805 = sbr.rel (%p803) target = $region72
        $region71: #{lc_forward.1} parent=51 // pred_region
          %s807 = ssub.s32 128, 128
          %808 = vsyncadd %s795, %s807
          %s809 = smul.addr %s29, 128
          %s810 = scalar_lea.hbm %s8, %s809
          %s812 = sshll.u32 %s798, 4
          %s813 = int_to_ptr.vmem [resolvable:$true] %s812
          %815 = dma.vmem_to_hbm [thread:$0]  %s813, 128, %s810, %s795
        $region72: #{lc_forward.1} parent=51 // pred_fallthru
          _
        // Predicated region
        $region73: #{lc_forward.1} parent=51 // pred_check
          %p816 = pneg %p256
        $region74: #{lc_forward.1} parent=51 // pred_check_branch
          %818 = sbr.rel (%p816) target = $region76
        $region75: #{lc_forward.1} parent=51 // pred_region
          _
        $region76: #{lc_forward.1} parent=51 // pred_fallthru
          _
      $region52: #{lc_forward.1} parent=5 // pred_fallthru
        _
      %p819 = scmp.le.s32.totalorder 2, %s24
      // Predicated region
      $region77: #{lc_forward.1} parent=5 // pred_check
        %p820 = pneg %p819
      $region78: #{lc_forward.1} parent=5 // pred_check_branch
        %822 = sbr.rel (%p820) target = $region80
      $region79: #{lc_forward.1} parent=5 // pred_region
        %s823 = ssub.s32 %s24, 2
        // Predicated region
        $region81: #{lc_forward.1} parent=79 // pred_check
          %p824 = pneg %p236
        $region82: #{lc_forward.1} parent=79 // pred_check_branch
          %826 = sbr.rel (%p824) target = $region84
        $region83: #{lc_forward.1} parent=79 // pred_region
          %s827 = sand.u32 %s221, 1
          %s828 = scalar_lea.sflag [#allocation4], %s827
          %s829 = sand.u32 %s221, 1
          %s830 = smul.addr %s829, 8
          %s831 = scalar_lea.vmem [#allocation10], %s830
          %832 = dma.done %s828, 128
        $region84: #{lc_forward.1} parent=79 // pred_fallthru
          _
        // Predicated region
        $region85: #{lc_forward.1} parent=79 // pred_check
          %p833 = pneg %p262
        $region86: #{lc_forward.1} parent=79 // pred_check_branch
          %835 = sbr.rel (%p833) target = $region88
        $region87: #{lc_forward.1} parent=79 // pred_region
          %p836 = scmp.lt.s32.totalorder %s30, 1
          %s837 = scalar_select %p836, %s30, 1
          %s838 = smul.addr %s837, 8
          %s839 = scalar_lea.vmem %s9, %s838
        $region88: #{lc_forward.1} parent=79 // pred_fallthru
          _
      $region80: #{lc_forward.1} parent=5 // pred_fallthru
        _
    $region6: #{lc_forward.1} parent=1 // loop_footer
      %s28 = sadd.s32 1, %s24
    $region7: #{lc_forward.1} parent=1 // loop_footer_branch
      %23 = sbr.rel target = $region3
    $region8: #{lc_forward.1} parent=1 // loop_exit
      _
    %840 = vsyncpa [#allocation3], 1
    %s841 = scalar_lea.sflag [#allocation3], 1
    %842 = vsyncpa %s841, 1
    %843 = vsyncpa [#allocation6], 1
    %844 = vsyncpa [#allocation9], 1
    %845 = vsyncpa [#allocation4], 1
    %s846 = scalar_lea.sflag [#allocation4], 1
    %847 = vsyncpa %s846, 1

</llo_original>
